<compile_context>
chip_gen: v7x
topology: tpu7x:2x2x1
jax: 0.10.0
libtpu: 0.0.40
codegen_flags: <defaults>
</compile_context>

<pallas_src>
import functools
import math

import jax
import jax.numpy as jnp
import numpy as np
from jax import lax
from jax.experimental import pallas as pl
from jax.experimental.pallas import tpu as pltpu


def _sum_exp_gamma_kernel(bi_tab_ref, bj_tab_ref,           # scalar prefetch (SMEM)
                          a1_ref, b2_ref, a2_ref, b1_ref,   # VMEM-resident inputs
                          out_ref,                          # HBM (pl.ANY) output
                          tile_ref, tile_t_ref, sem,        # scratch
                          *, tile, gammas, inv_ls, neg_gamma_log_ls):
    t = pl.program_id(0)
    bi = bi_tab_ref[t]
    bj = bj_tab_ref[t]
    ri = pl.multiple_of(bi * tile, tile)
    rj = pl.multiple_of(bj * tile, tile)

    # Row blocks of the augmented operands (resident in VMEM, sliced in place).
    a1 = a1_ref[pl.ds(ri, tile), :]      # [ x1,  |x1|^2, 1 ]   rows of block bi
    b2 = b2_ref[pl.ds(rj, tile), :]      # [-2*x2, 1, |x2|^2]   rows of block bj
    a2 = a2_ref[pl.ds(ri, tile), :]      # [ x2,  |x2|^2, 1 ]   rows of block bi
    b1 = b1_ref[pl.ds(rj, tile), :]      # [-2*x1, 1, |x1|^2]   rows of block bj

    # One MXU dot per distance tile: aug_a . aug_b == ||a - b||^2.
    dims = (((1,), (1,)), ((), ()))
    d2_ij = lax.dot_general(a1, b2, dims, preferred_element_type=jnp.float32)
    d2_ji = lax.dot_general(a2, b1, dims, preferred_element_type=jnp.float32)
    d_ij = jnp.sqrt(jnp.maximum(d2_ij, 0.0))   # cdist(x1_i, x2_j) tile
    d_ji = jnp.sqrt(jnp.maximum(d2_ji, 0.0))   # cdist(x2_i, x1_j) == (D.T) tile
    # NOTE: for diagonal tiles d_ji == d_ij.T; gating the second dot+sqrt on
    # bi == bj would only save ~2/(nt+1) of one sqrt, not worth the branch.

    base = jnp.maximum((d_ij + d_ji) * 0.5, 1e-36)   # symmetrize + clamp once

    log_d = None      # shared log(base), computed lazily at most once per tile
    acc = None
    for g, ils, ngl in zip(gammas, inv_ls, neg_gamma_log_ls):
        if g == 1.0:
            term = jnp.exp(-(base * ils))                  # 1 EUP op
        elif g == 0.5:
            term = jnp.exp(-jnp.sqrt(base * ils))          # sqrt + exp
        else:
            if log_d is None:
                log_d = jnp.log(base)                      # amortized once
            # (d/ls)^g = exp(g*log(d) - g*log(ls));  base >= 1e-36 so finite.
            term = jnp.exp(-jnp.exp(g * log_d + ngl))      # 2 EUP ops
        acc = term if acc is None else acc + term

    # Write the (bi, bj) tile; for off-diagonal tiles also write its transpose
    # to (bj, bi) (XLU transpose -- the XLU has slack, the kernel is EUP-bound).
    tile_ref[...] = acc
    cp_ij = pltpu.make_async_copy(
        tile_ref, out_ref.at[pl.ds(ri, tile), pl.ds(rj, tile)], sem.at[0])
    cp_ij.start()

    @pl.when(bi != bj)
    def _():
        tile_t_ref[...] = tile_ref[...].T
        cp_ji = pltpu.make_async_copy(
            tile_t_ref, out_ref.at[pl.ds(rj, tile), pl.ds(ri, tile)], sem.at[1])
        cp_ji.start()
        cp_ji.wait()

    cp_ij.wait()


def _choose_tile_and_pad(n):
    """Largest lane-dense tile dividing n, else pad n up (never a full-N block)."""
    for t in (512, 256, 128):
        if n % t == 0:
            return t, n
    if n <= 512:
        t = ((n + 127) // 128) * 128
        return t, t
    t = 256
    return t, ((n + t - 1) // t) * t


def sum_exp_gamma_kernels(x1, x2, gamma_vals, lengthscale_vals):
    """Pallas equivalent of SumExpGammaKernels.forward (gamma/ls are constants)."""
    n1, f1 = x1.shape
    n2, f2 = x2.shape
    assert f1 == f2
    assert n1 == n2, "symmetrization (d + d.T)/2 requires a square kernel matrix"
    n, f = n1, f1

    gammas = tuple(float(g) for g in np.asarray(gamma_vals, dtype=np.float64))
    lss = tuple(float(l) for l in np.asarray(lengthscale_vals, dtype=np.float64))
    assert all(g > 0.0 for g in gammas), "gamma must be positive"
    inv_ls = tuple(1.0 / l for l in lss)
    neg_gamma_log_ls = tuple(-g * math.log(l) for g, l in zip(gammas, lss))
    num_kernels = len(gammas)

    tile, npad = _choose_tile_and_pad(n)
    nt = npad // tile
    tri = [(i, j) for i in range(nt) for j in range(i, nt)]
    num_tiles = len(tri)                              # nt * (nt + 1) // 2
    bi_tab = jnp.asarray(np.asarray([p[0] for p in tri], dtype=np.int32))
    bj_tab = jnp.asarray(np.asarray([p[1] for p in tri], dtype=np.int32))

    x1f = jnp.asarray(x1, dtype=jnp.float32)
    x2f = jnp.asarray(x2, dtype=jnp.float32)
    # Shared-mean centering: distances are translation invariant, but this keeps
    # the ||a||^2 + ||b||^2 - 2 a.b expansion well conditioned.
    mu = 0.5 * (jnp.mean(x1f, axis=0) + jnp.mean(x2f, axis=0))
    x1c = x1f - mu
    x2c = x2f - mu
    if npad != n:
        x1c = jnp.pad(x1c, ((0, npad - n), (0, 0)))
        x2c = jnp.pad(x2c, ((0, npad - n), (0, 0)))

    sq1 = jnp.sum(x1c * x1c, axis=1, keepdims=True)   # (npad, 1)
    sq2 = jnp.sum(x2c * x2c, axis=1, keepdims=True)
    ones = jnp.ones((npad, 1), dtype=jnp.float32)
    # Augmented operands so a single dot gives the squared distance:
    #   [x, |x|^2, 1] . [-2*y, 1, |y|^2] = |x|^2 + |y|^2 - 2 x.y
    a1 = jnp.concatenate([x1c, sq1, ones], axis=1)        # (npad, f+2)
    b2 = jnp.concatenate([-2.0 * x2c, ones, sq2], axis=1)
    a2 = jnp.concatenate([x2c, sq2, ones], axis=1)
    b1 = jnp.concatenate([-2.0 * x1c, ones, sq1], axis=1)

    kernel = functools.partial(
        _sum_exp_gamma_kernel,
        tile=tile, gammas=gammas, inv_ls=inv_ls,
        neg_gamma_log_ls=neg_gamma_log_ls)

    # EUP count: 2 sqrts for the two distance tiles + per-gamma exp/sqrt chain.
    eup_per_elem = 2 + sum(1 if g == 1.0 else 2 for g in gammas)
    if any(g not in (1.0, 0.5) for g in gammas):
        eup_per_elem += 1                                 # shared log, amortized
    elems = num_tiles * tile * tile
    cost = pl.CostEstimate(
        flops=int(elems * (4 * (f + 2) + 6 * num_kernels)),
        transcendentals=int(elems * eup_per_elem),
        bytes_accessed=int(4 * npad * (f + 2) * 4 + npad * npad * 4),
    )

    # TODO(synk): for very large N, switch these resident inputs back to tiled
    # BlockSpecs indexed through the prefetch tables to bound VMEM use.
    resident = pl.BlockSpec((npad, f + 2), lambda t, bi, bj: (0, 0))

    out_full = pl.pallas_call(
        kernel,
        out_shape=jax.ShapeDtypeStruct((npad, npad), jnp.float32),
        grid_spec=pltpu.PrefetchScalarGridSpec(
            num_scalar_prefetch=2,
            grid=(num_tiles,),
            in_specs=[resident, resident, resident, resident],
            out_specs=pl.BlockSpec(memory_space=pl.ANY),
            scratch_shapes=[
                pltpu.VMEM((tile, tile), jnp.float32),
                pltpu.VMEM((tile, tile), jnp.float32),
                pltpu.SemaphoreType.DMA((2,)),
            ],
        ),
        compiler_params=pltpu.CompilerParams(
            dimension_semantics=("parallel",),
            vmem_limit_bytes=48 * 1024 * 1024,   # headroom under v7x's 64 MiB
        ),
        cost_estimate=cost,
    )(bi_tab, bj_tab, a1, b2, a2, b1)

    if npad != n:
        return out_full[:n, :n]
    return out_full


def _reference(x1, x2, gamma_vals, lengthscale_vals):
    """Pure-JAX reference mirroring the PyTorch forward."""
    K = jnp.zeros((x1.shape[0], x2.shape[0]), dtype=jnp.float32)
    for g, ls in zip(np.asarray(gamma_vals), np.asarray(lengthscale_vals)):
        a = x1 / ls
        b = x2 / ls
        d2 = jnp.sum((a[:, None, :] - b[None, :, :]) ** 2, axis=-1)
        d = jnp.sqrt(jnp.maximum(d2, 0.0))
        d = jnp.maximum(d, 1e-36)
        d = (d + d.T) / 2.0
        K = K + jnp.exp(-(d ** float(g)))
    return K


if __name__ == "__main__":
    # Deterministic "module init": num_kernels=3 with fixed gamma / lengthscale.
    num_kernels = 3
    gamma_vals = np.array([0.5, 0.8, 1.0], dtype=np.float32)
    lengthscale_vals = np.array([1.0, 2.0, 0.5], dtype=np.float32)

    # Small shapes consistent with the forward: x1, x2 of shape (N, F), N1 == N2.
    N, F = 384, 8        # 3x3 blocks of 128 -> exercises diagonal + off-diagonal
    key = jax.random.PRNGKey(0)
    k1, k2 = jax.random.split(key)
    x1 = jax.random.normal(k1, (N, F), dtype=jnp.float32)
    x2 = jax.random.normal(k2, (N, F), dtype=jnp.float32)

    out = jax.block_until_ready(
        sum_exp_gamma_kernels(x1, x2, gamma_vals, lengthscale_vals))
    ref = _reference(x1, x2, gamma_vals, lengthscale_vals)
    np.testing.assert_allclose(np.asarray(out), np.asarray(ref),
                               rtol=1e-4, atol=1e-4)

    # Also exercise the padded path (N not divisible by 128).
    N2 = 200
    k3, k4 = jax.random.split(jax.random.PRNGKey(1))
    x1b = jax.random.normal(k3, (N2, F), dtype=jnp.float32)
    x2b = jax.random.normal(k4, (N2, F), dtype=jnp.float32)
    out2 = jax.block_until_ready(
        sum_exp_gamma_kernels(x1b, x2b, gamma_vals, lengthscale_vals))
    ref2 = _reference(x1b, x2b, gamma_vals, lengthscale_vals)
    np.testing.assert_allclose(np.asarray(out2), np.asarray(ref2),
                               rtol=1e-4, atol=1e-4)

    print("KERNEL_OK")
</pallas_src>

<mosaic_0001>
module attributes {stable_mosaic.version = 11 : i64} {
  func.func @_sum_exp_gamma_kernel(%arg0: i32, %arg1: memref<6xi32, #tpu.memory_space<smem>>, %arg2: memref<6xi32, #tpu.memory_space<smem>>, %arg3: memref<384x10xf32, #tpu.memory_space<vmem>>, %arg4: memref<384x10xf32, #tpu.memory_space<vmem>>, %arg5: memref<384x10xf32, #tpu.memory_space<vmem>>, %arg6: memref<384x10xf32, #tpu.memory_space<vmem>>, %arg7: memref<384x384xf32, #tpu.memory_space<any>>, %arg8: memref<128x128xf32, #tpu.memory_space<vmem>>, %arg9: memref<128x128xf32, #tpu.memory_space<vmem>>, %arg10: memref<2x!tpu.dma_semaphore, #tpu.memory_space<semaphore_mem>>) attributes {dimension_semantics = [#tpu.dimension_semantics<parallel>], iteration_bounds = array<i64: 6>, scalar_prefetch = 2 : i64, scratch_operands = 3 : i64, tpu.core_type = #tpu.core_type<tc>, window_params = [{pipeline_mode = #tpu.pipeline_mode<synchronous>, transform_indices = @transform_0, window_bounds = array<i64: 384, 10>}, {pipeline_mode = #tpu.pipeline_mode<synchronous>, transform_indices = @transform_1, window_bounds = array<i64: 384, 10>}, {pipeline_mode = #tpu.pipeline_mode<synchronous>, transform_indices = @transform_2, window_bounds = array<i64: 384, 10>}, {pipeline_mode = #tpu.pipeline_mode<synchronous>, transform_indices = @transform_3, window_bounds = array<i64: 384, 10>}, {}]} {
    %0 = arith.index_cast %arg0 : i32 to index
    %1 = memref.load %arg1[%0] : memref<6xi32, #tpu.memory_space<smem>>
    %2 = arith.index_cast %arg0 : i32 to index
    %3 = memref.load %arg2[%2] : memref<6xi32, #tpu.memory_space<smem>>
    %c128_i32 = arith.constant 128 : i32
    %4 = arith.muli %1, %c128_i32 : i32
    %5 = tpu.assume_multiple %4, 128 : i32
    %c128_i32_0 = arith.constant 128 : i32
    %6 = arith.muli %3, %c128_i32_0 : i32
    %7 = tpu.assume_multiple %6, 128 : i32
    %8 = arith.index_cast %5 : i32 to index
    %c0 = arith.constant 0 : index
    %9 = vector.load %arg3[%8, %c0] : memref<384x10xf32, #tpu.memory_space<vmem>>, vector<128x10xf32>
    %10 = arith.index_cast %7 : i32 to index
    %c0_1 = arith.constant 0 : index
    %11 = vector.load %arg4[%10, %c0_1] : memref<384x10xf32, #tpu.memory_space<vmem>>, vector<128x10xf32>
    %12 = arith.index_cast %5 : i32 to index
    %c0_2 = arith.constant 0 : index
    %13 = vector.load %arg5[%12, %c0_2] : memref<384x10xf32, #tpu.memory_space<vmem>>, vector<128x10xf32>
    %14 = arith.index_cast %7 : i32 to index
    %c0_3 = arith.constant 0 : index
    %15 = vector.load %arg6[%14, %c0_3] : memref<384x10xf32, #tpu.memory_space<vmem>>, vector<128x10xf32>
    %cst = arith.constant dense<0.000000e+00> : vector<128x128xf32>
    %16 = tpu.matmul %9, %11, %cst {dimension_numbers = #tpu.dot_dimension_numbers<[1], [1], [0], [0], [0, 0, 1, 0], [], []>} : vector<128x10xf32>, vector<128x10xf32>, vector<128x128xf32> -> vector<128x128xf32>
    %cst_4 = arith.constant dense<0.000000e+00> : vector<128x128xf32>
    %17 = tpu.matmul %13, %15, %cst_4 {dimension_numbers = #tpu.dot_dimension_numbers<[1], [1], [0], [0], [0, 0, 1, 0], [], []>} : vector<128x10xf32>, vector<128x10xf32>, vector<128x128xf32> -> vector<128x128xf32>
    %cst_5 = arith.constant 0.000000e+00 : f32
    %18 = vector.broadcast %cst_5 : f32 to vector<128x128xf32>
    %19 = arith.maximumf %16, %18 : vector<128x128xf32>
    %20 = math.sqrt %19 : vector<128x128xf32>
    %cst_6 = arith.constant 0.000000e+00 : f32
    %21 = vector.broadcast %cst_6 : f32 to vector<128x128xf32>
    %22 = arith.maximumf %17, %21 : vector<128x128xf32>
    %23 = math.sqrt %22 : vector<128x128xf32>
    %24 = arith.addf %20, %23 : vector<128x128xf32>
    %cst_7 = arith.constant 5.000000e-01 : f32
    %25 = vector.broadcast %cst_7 : f32 to vector<128x128xf32>
    %26 = arith.mulf %24, %25 : vector<128x128xf32>
    %cst_8 = arith.constant 1.000000e-36 : f32
    %27 = vector.broadcast %cst_8 : f32 to vector<128x128xf32>
    %28 = arith.maximumf %26, %27 : vector<128x128xf32>
    %cst_9 = arith.constant 1.000000e+00 : f32
    %29 = vector.broadcast %cst_9 : f32 to vector<128x128xf32>
    %30 = arith.mulf %28, %29 : vector<128x128xf32>
    %31 = math.sqrt %30 : vector<128x128xf32>
    %cst_10 = arith.constant 0.000000e+00 : f32
    %32 = vector.broadcast %cst_10 : f32 to vector<128x128xf32>
    %33 = arith.subf %32, %31 : vector<128x128xf32>
    %34 = math.exp %33 : vector<128x128xf32>
    %35 = math.log %28 : vector<128x128xf32>
    %cst_11 = arith.constant 8.000000e-01 : f32
    %36 = vector.broadcast %cst_11 : f32 to vector<128x128xf32>
    %37 = arith.mulf %36, %35 : vector<128x128xf32>
    %cst_12 = arith.constant -0.554517746 : f32
    %38 = vector.broadcast %cst_12 : f32 to vector<128x128xf32>
    %39 = arith.addf %37, %38 : vector<128x128xf32>
    %40 = math.exp %39 : vector<128x128xf32>
    %cst_13 = arith.constant 0.000000e+00 : f32
    %41 = vector.broadcast %cst_13 : f32 to vector<128x128xf32>
    %42 = arith.subf %41, %40 : vector<128x128xf32>
    %43 = math.exp %42 : vector<128x128xf32>
    %44 = arith.addf %34, %43 : vector<128x128xf32>
    %cst_14 = arith.constant 2.000000e+00 : f32
    %45 = vector.broadcast %cst_14 : f32 to vector<128x128xf32>
    %46 = arith.mulf %28, %45 : vector<128x128xf32>
    %cst_15 = arith.constant 0.000000e+00 : f32
    %47 = vector.broadcast %cst_15 : f32 to vector<128x128xf32>
    %48 = arith.subf %47, %46 : vector<128x128xf32>
    %49 = math.exp %48 : vector<128x128xf32>
    %50 = arith.addf %44, %49 : vector<128x128xf32>
    %c0_16 = arith.constant 0 : index
    %c0_17 = arith.constant 0 : index
    %51 = vector.load %arg8[%c0_16, %c0_17] : memref<128x128xf32, #tpu.memory_space<vmem>>, vector<128x128xf32>
    tpu.vector_store %arg8[%c0_16, %c0_17], %50 {strides = array<i32>} : memref<128x128xf32, #tpu.memory_space<vmem>>, vector<128x128xf32>,
    %c0_i32 = arith.constant 0 : i32
    %52 = tpu.memref_slice %arg7[%5, %7] : memref<384x384xf32, #tpu.memory_space<any>> -> memref<128x128xf32, #tpu.memory_space<any>>
    %53 = tpu.memref_slice %arg10[%c0_i32] : memref<2x!tpu.dma_semaphore, #tpu.memory_space<semaphore_mem>> -> memref<1x!tpu.dma_semaphore, #tpu.memory_space<semaphore_mem>>
    %54 = tpu.memref_squeeze %53 : memref<1x!tpu.dma_semaphore, #tpu.memory_space<semaphore_mem>> -> memref<!tpu.dma_semaphore, #tpu.memory_space<semaphore_mem>>
    tpu.enqueue_dma source(%arg8 : memref<128x128xf32, #tpu.memory_space<vmem>>) target(%52 : memref<128x128xf32, #tpu.memory_space<any>>) target_semaphore(%54 : memref<!tpu.dma_semaphore, #tpu.memory_space<semaphore_mem>>)
    %55 = arith.cmpi ne, %1, %3 : i32
    %56 = arith.extui %55 : i1 to i32
    %c0_i32_18 = arith.constant 0 : i32
    %57 = arith.cmpi ne, %56, %c0_i32_18 : i32
    scf.if %57 {
      %c0_20 = arith.constant 0 : index
      %c0_21 = arith.constant 0 : index
      %61 = vector.load %arg8[%c0_20, %c0_21] : memref<128x128xf32, #tpu.memory_space<vmem>>, vector<128x128xf32>
      %62 = tpu.transpose %61, [1, 0] : vector<128x128xf32> -> vector<128x128xf32>
      %c0_22 = arith.constant 0 : index
      %c0_23 = arith.constant 0 : index
      %63 = vector.load %arg9[%c0_22, %c0_23] : memref<128x128xf32, #tpu.memory_space<vmem>>, vector<128x128xf32>
      tpu.vector_store %arg9[%c0_22, %c0_23], %62 {strides = array<i32>} : memref<128x128xf32, #tpu.memory_space<vmem>>, vector<128x128xf32>,
      %c1_i32 = arith.constant 1 : i32
      %64 = tpu.memref_slice %arg7[%7, %5] : memref<384x384xf32, #tpu.memory_space<any>> -> memref<128x128xf32, #tpu.memory_space<any>>
      %65 = tpu.memref_slice %arg10[%c1_i32] : memref<2x!tpu.dma_semaphore, #tpu.memory_space<semaphore_mem>> -> memref<1x!tpu.dma_semaphore, #tpu.memory_space<semaphore_mem>>
      %66 = tpu.memref_squeeze %65 : memref<1x!tpu.dma_semaphore, #tpu.memory_space<semaphore_mem>> -> memref<!tpu.dma_semaphore, #tpu.memory_space<semaphore_mem>>
      tpu.enqueue_dma source(%arg9 : memref<128x128xf32, #tpu.memory_space<vmem>>) target(%64 : memref<128x128xf32, #tpu.memory_space<any>>) target_semaphore(%66 : memref<!tpu.dma_semaphore, #tpu.memory_space<semaphore_mem>>)
      %c1_i32_24 = arith.constant 1 : i32
      %67 = tpu.memref_slice %arg7[%7, %5] : memref<384x384xf32, #tpu.memory_space<any>> -> memref<128x128xf32, #tpu.memory_space<any>>
      %68 = tpu.memref_slice %arg10[%c1_i32_24] : memref<2x!tpu.dma_semaphore, #tpu.memory_space<semaphore_mem>> -> memref<1x!tpu.dma_semaphore, #tpu.memory_space<semaphore_mem>>
      %69 = tpu.memref_squeeze %68 : memref<1x!tpu.dma_semaphore, #tpu.memory_space<semaphore_mem>> -> memref<!tpu.dma_semaphore, #tpu.memory_space<semaphore_mem>>
      tpu.wait_dma2 semaphore(%69 : memref<!tpu.dma_semaphore, #tpu.memory_space<semaphore_mem>>) src(%arg9 : memref<128x128xf32, #tpu.memory_space<vmem>>) dst(%67 : memref<128x128xf32, #tpu.memory_space<any>>)
    } else {
    }
    %c0_i32_19 = arith.constant 0 : i32
    %58 = tpu.memref_slice %arg7[%5, %7] : memref<384x384xf32, #tpu.memory_space<any>> -> memref<128x128xf32, #tpu.memory_space<any>>
    %59 = tpu.memref_slice %arg10[%c0_i32_19] : memref<2x!tpu.dma_semaphore, #tpu.memory_space<semaphore_mem>> -> memref<1x!tpu.dma_semaphore, #tpu.memory_space<semaphore_mem>>
    %60 = tpu.memref_squeeze %59 : memref<1x!tpu.dma_semaphore, #tpu.memory_space<semaphore_mem>> -> memref<!tpu.dma_semaphore, #tpu.memory_space<semaphore_mem>>
    tpu.wait_dma2 semaphore(%60 : memref<!tpu.dma_semaphore, #tpu.memory_space<semaphore_mem>>) src(%arg8 : memref<128x128xf32, #tpu.memory_space<vmem>>) dst(%58 : memref<128x128xf32, #tpu.memory_space<any>>)
    return
  }
  func.func @transform_0(%arg0: i32, %arg1: memref<6xi32, #tpu.memory_space<smem>>, %arg2: memref<6xi32, #tpu.memory_space<smem>>) -> (i32, i32) {
    %c0_i32 = arith.constant 0 : i32
    %c0_i32_0 = arith.constant 0 : i32
    %c0_i32_1 = arith.constant 0 : i32
    return %c0_i32, %c0_i32_0 : i32, i32
  }
  func.func @transform_1(%arg0: i32, %arg1: memref<6xi32, #tpu.memory_space<smem>>, %arg2: memref<6xi32, #tpu.memory_space<smem>>) -> (i32, i32) {
    %c0_i32 = arith.constant 0 : i32
    %c0_i32_0 = arith.constant 0 : i32
    %c0_i32_1 = arith.constant 0 : i32
    return %c0_i32, %c0_i32_0 : i32, i32
  }
  func.func @transform_2(%arg0: i32, %arg1: memref<6xi32, #tpu.memory_space<smem>>, %arg2: memref<6xi32, #tpu.memory_space<smem>>) -> (i32, i32) {
    %c0_i32 = arith.constant 0 : i32
    %c0_i32_0 = arith.constant 0 : i32
    %c0_i32_1 = arith.constant 0 : i32
    return %c0_i32, %c0_i32_0 : i32, i32
  }
  func.func @transform_3(%arg0: i32, %arg1: memref<6xi32, #tpu.memory_space<smem>>, %arg2: memref<6xi32, #tpu.memory_space<smem>>) -> (i32, i32) {
    %c0_i32 = arith.constant 0 : i32
    %c0_i32_0 = arith.constant 0 : i32
    %c0_i32_1 = arith.constant 0 : i32
    return %c0_i32, %c0_i32_0 : i32, i32
  }
}

</mosaic_0001>

<llo_original>
// kernel: tpu_custom_call.1
$region0: #{tpu_custom_call.1}
  #allocation0 [shape = 'u32[]', space=smem, size = 0x4, offset = 0x4, fixed_abs, tag = 'smem constant byte address 0x4 - core index']
  #allocation1 [shape = 'u32[144,128]{1,0:T(1,128)}', space=vmem, size = 0x12000, scoped, tag = 'internal scratch']
  #allocation2 [shape = 'f32[128,128]{1,0:T(8,128)}', space=vmem, size = 0x10000, scoped, tag = 'scratch operand']
  #allocation3 [shape = 'f32[128,128]{1,0:T(8,128)}', space=vmem, size = 0x10000, scoped, tag = 'scratch operand']
  #allocation4 [shape = 's32[2]{0}', space=sflag, size = 0x8, scoped, tag = 'scratch operand']
  #allocation5 [shape = 's32[1]{0}', space=sflag, size = 0x4, scoped, tag = 'scoped memory for tpu_custom_call.1']
  #allocation6 [shape = 'u8[512]{0}', space=smem, size = 0x200, scoped, tag = 'prefetched SMEM operand 0']
  #allocation7 [shape = 'u8[512]{0}', space=smem, size = 0x200, scoped, tag = 'prefetched SMEM operand 1']
  #allocation8 [shape = 's32[]', space=sflag, size = 0x4, offset = 0, fixed_abs, tag = 'sflag constant byte address 0x0 - dummy sync flag']
  #allocation9 [shape = 's32[]', space=sflag, size = 0x4, offset = 0, fixed_abs, tag = 'sflag constant byte address 0x0 - dummy sync flag']
  %s0 = inlined_call_operand.vmem [shape: s32[6], index: 0, kind: input, shape index: {}]
  %s1 = inlined_call_operand.vmem [shape: s32[6], index: 1, kind: input, shape index: {}]
  %s2 = inlined_call_operand.vmem [shape: f32[384,10], index: 2, kind: input, shape index: {}]
  %s3 = inlined_call_operand.vmem [shape: f32[384,10], index: 3, kind: input, shape index: {}]
  %s4 = inlined_call_operand.vmem [shape: f32[384,10], index: 4, kind: input, shape index: {}]
  %s5 = inlined_call_operand.vmem [shape: f32[384,10], index: 5, kind: input, shape index: {}]
  %s6 = inlined_call_operand.hbm [shape: f32[384,384], index: 6, kind: output, shape index: {}]
  %s7 = sld [smem:[#allocation0]]
  $region41: #{tpu_custom_call.1} parent=0
    _
  %s9 = ssub.s32 1, %s7
  %s10 = scalar_select 0, %s9, %s7
  %s11 = sshll.u32 %s0, 4
  %s12 = int_to_ptr.vmem [resolvable:$true] %s11
  %14 = dma.vmem_to_smem %s12, 16, [#allocation6], [#allocation5]
  %s15 = sshll.u32 %s1, 4
  %s16 = int_to_ptr.vmem [resolvable:$true] %s15
  %18 = dma.vmem_to_smem %s16, 16, [#allocation7], [#allocation5]
  %19 = dma.done [#allocation5], 32
  %20 = sfence
  loop: start=0, step=1, limit=7
  $region2: #{tpu_custom_call.1} parent=0 // loop_pre_header
    _
  $region3: #{tpu_custom_call.1} parent=0 // loop_header
    %s22 = sphi 0, %s26
    %p23 = scmp.ge.s32.totalorder %s22, 7
    %s29 = sphi 0, %s29
    %s31 = sphi 0, %s29
    %s39 = sphi 0, %s31
    %s43 = sphi 0, %s43
    %s45 = sphi 0, %s43
    %s53 = sphi 0, %s45
    %s57 = sphi 0, %s57
    %s59 = sphi 0, %s57
    %s67 = sphi 0, %s59
    %s71 = sphi 0, %s71
    %s73 = sphi 0, %s71
    %s81 = sphi 0, %s73
  $region4: #{tpu_custom_call.1} parent=0 // loop_header_branch
    %25 = sbr.rel (%p23) target = $region8
  $region5: #{tpu_custom_call.1} parent=0 // loop_body
    %s27 = ssub.s32 %s22, 1
    %s28 = sadd.s32 %s22, 1
    %s30 = sadd.s32 %s29, 1
    %p32 = scmp.eq.s32.totalorder %s22, 5
    %p33 = scmp.ne.s32.totalorder %s29, %s31
    %p34 = scmp.eq.s32.totalorder %s22, 0
    %p35 = por %p33, %p34
    %p36 = scmp.ne.s32.totalorder %s29, %s31
    %p37 = scmp.eq.s32.totalorder %s27, 5
    %p38 = por %p36, %p37
    %p40 = scmp.ne.s32.totalorder %s31, %s39
    %p41 = scmp.eq.s32.totalorder %s27, 0
    %p42 = por %p40, %p41
    %s44 = sadd.s32 %s43, 1
    %p46 = scmp.eq.s32.totalorder %s22, 5
    %p47 = scmp.ne.s32.totalorder %s43, %s45
    %p48 = scmp.eq.s32.totalorder %s22, 0
    %p49 = por %p47, %p48
    %p50 = scmp.ne.s32.totalorder %s43, %s45
    %p51 = scmp.eq.s32.totalorder %s27, 5
    %p52 = por %p50, %p51
    %p54 = scmp.ne.s32.totalorder %s45, %s53
    %p55 = scmp.eq.s32.totalorder %s27, 0
    %p56 = por %p54, %p55
    %s58 = sadd.s32 %s57, 1
    %p60 = scmp.eq.s32.totalorder %s22, 5
    %p61 = scmp.ne.s32.totalorder %s57, %s59
    %p62 = scmp.eq.s32.totalorder %s22, 0
    %p63 = por %p61, %p62
    %p64 = scmp.ne.s32.totalorder %s57, %s59
    %p65 = scmp.eq.s32.totalorder %s27, 5
    %p66 = por %p64, %p65
    %p68 = scmp.ne.s32.totalorder %s59, %s67
    %p69 = scmp.eq.s32.totalorder %s27, 0
    %p70 = por %p68, %p69
    %s72 = sadd.s32 %s71, 1
    %p74 = scmp.eq.s32.totalorder %s22, 5
    %p75 = scmp.ne.s32.totalorder %s71, %s73
    %p76 = scmp.eq.s32.totalorder %s22, 0
    %p77 = por %p75, %p76
    %p78 = scmp.ne.s32.totalorder %s71, %s73
    %p79 = scmp.eq.s32.totalorder %s27, 5
    %p80 = por %p78, %p79
    %p82 = scmp.ne.s32.totalorder %s73, %s81
    %p83 = scmp.eq.s32.totalorder %s27, 0
    %p84 = por %p82, %p83
    %p85 = scmp.le.s32.totalorder 1, %s22
    // Predicated region
    $region9: #{tpu_custom_call.1} parent=5 // pred_check
      %p86 = pneg %p85
    $region10: #{tpu_custom_call.1} parent=5 // pred_check_branch
      %88 = sbr.rel (%p86) target = $region12
    $region11: #{tpu_custom_call.1} parent=5 // pred_region
      %s89 = ssub.s32 %s22, 1
      // Predicated region
      $region13: #{tpu_custom_call.1} parent=11 // pred_check
        %p90 = pneg %p42
      $region14: #{tpu_custom_call.1} parent=11 // pred_check_branch
        %92 = sbr.rel (%p90) target = $region16
      $region15: #{tpu_custom_call.1} parent=11 // pred_region
        _
      $region16: #{tpu_custom_call.1} parent=11 // pred_fallthru
        _
      // Predicated region
      $region17: #{tpu_custom_call.1} parent=11 // pred_check
        %p93 = pneg %p56
      $region18: #{tpu_custom_call.1} parent=11 // pred_check_branch
        %95 = sbr.rel (%p93) target = $region20
      $region19: #{tpu_custom_call.1} parent=11 // pred_region
        _
      $region20: #{tpu_custom_call.1} parent=11 // pred_fallthru
        _
      // Predicated region
      $region21: #{tpu_custom_call.1} parent=11 // pred_check
        %p96 = pneg %p70
      $region22: #{tpu_custom_call.1} parent=11 // pred_check_branch
        %98 = sbr.rel (%p96) target = $region24
      $region23: #{tpu_custom_call.1} parent=11 // pred_region
        _
      $region24: #{tpu_custom_call.1} parent=11 // pred_fallthru
        _
      // Predicated region
      $region25: #{tpu_custom_call.1} parent=11 // pred_check
        %p99 = pneg %p84
      $region26: #{tpu_custom_call.1} parent=11 // pred_check_branch
        %101 = sbr.rel (%p99) target = $region28
      $region27: #{tpu_custom_call.1} parent=11 // pred_region
        _
      $region28: #{tpu_custom_call.1} parent=11 // pred_fallthru
        _
    $region12: #{tpu_custom_call.1} parent=5 // pred_fallthru
      _
    %p102 = scmp.lt.s32.totalorder %s22, 6
    // Predicated region
    $region29: #{tpu_custom_call.1} parent=5 // pred_check
      %p103 = pneg %p102
    $region30: #{tpu_custom_call.1} parent=5 // pred_check_branch
      %105 = sbr.rel (%p103) target = $region32
    $region31: #{tpu_custom_call.1} parent=5 // pred_region
      _
    $region32: #{tpu_custom_call.1} parent=5 // pred_fallthru
      _
    %p106 = scmp.le.s32.totalorder 1, %s22
    // Predicated region
    $region33: #{tpu_custom_call.1} parent=5 // pred_check
      %p107 = pneg %p106
    $region34: #{tpu_custom_call.1} parent=5 // pred_check_branch
      %109 = sbr.rel (%p107) target = $region36
    $region35: #{tpu_custom_call.1} parent=5 // pred_region
      %s110 = ssub.s32 %s22, 1
      %p111 = pneg %p42
      %p112 = pneg %p38
      %p113 = pneg %p56
      %p114 = pneg %p52
      %p115 = pneg %p70
      %p116 = pneg %p66
      %p117 = pneg %p84
      %p118 = pneg %p80
      %s119 = sld [smem:[#allocation6 + %s27]]
      %s120 = sld [smem:[#allocation7 + %s27]]
      %s121 = smul.u32 %s119, 128
      %s122 = smul.u32 %s120, 128
      %s123 = scalar_lea.vmem %s2, %s121
      %v124 = vld [vmem:[%s123] sm:$0xff]
      %v125 = vld [vmem:[%s123 + $0x8] sm:$0xff]
      %v126 = vld [vmem:[%s123 + $0x10] sm:$0xff]
      %v127 = vld [vmem:[%s123 + $0x18] sm:$0xff]
      %v128 = vld [vmem:[%s123 + $0x20] sm:$0xff]
      %v129 = vld [vmem:[%s123 + $0x28] sm:$0xff]
      %v130 = vld [vmem:[%s123 + $0x30] sm:$0xff]
      %v131 = vld [vmem:[%s123 + $0x38] sm:$0xff]
      %v132 = vld [vmem:[%s123 + $0x40] sm:$0xff]
      %v133 = vld [vmem:[%s123 + $0x48] sm:$0xff]
      %v134 = vld [vmem:[%s123 + $0x50] sm:$0xff]
      %v135 = vld [vmem:[%s123 + $0x58] sm:$0xff]
      %v136 = vld [vmem:[%s123 + $0x60] sm:$0xff]
      %v137 = vld [vmem:[%s123 + $0x68] sm:$0xff]
      %v138 = vld [vmem:[%s123 + $0x70] sm:$0xff]
      %v139 = vld [vmem:[%s123 + $0x78] sm:$0xff]
      %s140 = scalar_lea.vmem %s3, %s122
      %v141 = vld [vmem:[%s140] sm:$0xff]
      %v142 = vld [vmem:[%s140 + $0x8] sm:$0xff]
      %v143 = vld [vmem:[%s140 + $0x10] sm:$0xff]
      %v144 = vld [vmem:[%s140 + $0x18] sm:$0xff]
      %v145 = vld [vmem:[%s140 + $0x20] sm:$0xff]
      %v146 = vld [vmem:[%s140 + $0x28] sm:$0xff]
      %v147 = vld [vmem:[%s140 + $0x30] sm:$0xff]
      %v148 = vld [vmem:[%s140 + $0x38] sm:$0xff]
      %v149 = vld [vmem:[%s140 + $0x40] sm:$0xff]
      %v150 = vld [vmem:[%s140 + $0x48] sm:$0xff]
      %v151 = vld [vmem:[%s140 + $0x50] sm:$0xff]
      %v152 = vld [vmem:[%s140 + $0x58] sm:$0xff]
      %v153 = vld [vmem:[%s140 + $0x60] sm:$0xff]
      %v154 = vld [vmem:[%s140 + $0x68] sm:$0xff]
      %v155 = vld [vmem:[%s140 + $0x70] sm:$0xff]
      %v156 = vld [vmem:[%s140 + $0x78] sm:$0xff]
      %s157 = scalar_lea.vmem %s4, %s121
      %v158 = vld [vmem:[%s157] sm:$0xff]
      %v159 = vld [vmem:[%s157 + $0x8] sm:$0xff]
      %v160 = vld [vmem:[%s157 + $0x10] sm:$0xff]
      %v161 = vld [vmem:[%s157 + $0x18] sm:$0xff]
      %v162 = vld [vmem:[%s157 + $0x20] sm:$0xff]
      %v163 = vld [vmem:[%s157 + $0x28] sm:$0xff]
      %v164 = vld [vmem:[%s157 + $0x30] sm:$0xff]
      %v165 = vld [vmem:[%s157 + $0x38] sm:$0xff]
      %v166 = vld [vmem:[%s157 + $0x40] sm:$0xff]
      %v167 = vld [vmem:[%s157 + $0x48] sm:$0xff]
      %v168 = vld [vmem:[%s157 + $0x50] sm:$0xff]
      %v169 = vld [vmem:[%s157 + $0x58] sm:$0xff]
      %v170 = vld [vmem:[%s157 + $0x60] sm:$0xff]
      %v171 = vld [vmem:[%s157 + $0x68] sm:$0xff]
      %v172 = vld [vmem:[%s157 + $0x70] sm:$0xff]
      %v173 = vld [vmem:[%s157 + $0x78] sm:$0xff]
      %s174 = scalar_lea.vmem %s5, %s122
      %v175 = vld [vmem:[%s174] sm:$0xff]
      %v176 = vld [vmem:[%s174 + $0x8] sm:$0xff]
      %v177 = vld [vmem:[%s174 + $0x10] sm:$0xff]
      %v178 = vld [vmem:[%s174 + $0x18] sm:$0xff]
      %v179 = vld [vmem:[%s174 + $0x20] sm:$0xff]
      %v180 = vld [vmem:[%s174 + $0x28] sm:$0xff]
      %v181 = vld [vmem:[%s174 + $0x30] sm:$0xff]
      %v182 = vld [vmem:[%s174 + $0x38] sm:$0xff]
      %v183 = vld [vmem:[%s174 + $0x40] sm:$0xff]
      %v184 = vld [vmem:[%s174 + $0x48] sm:$0xff]
      %v185 = vld [vmem:[%s174 + $0x50] sm:$0xff]
      %v186 = vld [vmem:[%s174 + $0x58] sm:$0xff]
      %v187 = vld [vmem:[%s174 + $0x60] sm:$0xff]
      %v188 = vld [vmem:[%s174 + $0x68] sm:$0xff]
      %v189 = vld [vmem:[%s174 + $0x70] sm:$0xff]
      %v190 = vld [vmem:[%s174 + $0x78] sm:$0xff]
      %vm191 = vcmask 80896
      %v193 = vsel %vm191, %v124, 0
      %v196 = vsel %vm191, %v125, 0
      %v199 = vsel %vm191, %v126, 0
      %v202 = vsel %vm191, %v127, 0
      %v205 = vsel %vm191, %v128, 0
      %v208 = vsel %vm191, %v129, 0
      %v211 = vsel %vm191, %v130, 0
      %v214 = vsel %vm191, %v131, 0
      %v217 = vsel %vm191, %v132, 0
      %v220 = vsel %vm191, %v133, 0
      %v223 = vsel %vm191, %v134, 0
      %v226 = vsel %vm191, %v135, 0
      %v229 = vsel %vm191, %v136, 0
      %v232 = vsel %vm191, %v137, 0
      %v235 = vsel %vm191, %v138, 0
      %v238 = vsel %vm191, %v139, 0
      %v241 = vsel %vm191, %v141, 0
      %v244 = vsel %vm191, %v142, 0
      %v247 = vsel %vm191, %v143, 0
      %v250 = vsel %vm191, %v144, 0
      %v253 = vsel %vm191, %v145, 0
      %v256 = vsel %vm191, %v146, 0
      %v259 = vsel %vm191, %v147, 0
      %v262 = vsel %vm191, %v148, 0
      %v265 = vsel %vm191, %v149, 0
      %v268 = vsel %vm191, %v150, 0
      %v271 = vsel %vm191, %v151, 0
      %v274 = vsel %vm191, %v152, 0
      %v277 = vsel %vm191, %v153, 0
      %v280 = vsel %vm191, %v154, 0
      %v283 = vsel %vm191, %v155, 0
      %v286 = vsel %vm191, %v156, 0
      %288 = vmatprep.subr.mxu0 0.0
      %289 = vmatpush1.xpose.msra.mxu0 %v241
      %290 = vmatprep.subr.mxu0 0.0
      %291 = vmatpush1.xpose.msra.mxu0 %v244
      %292 = vmatprep.subr.mxu0 0.0
      %293 = vmatpush1.xpose.msra.mxu0 %v247
      %294 = vmatprep.subr.mxu0 0.0
      %295 = vmatpush1.xpose.msra.mxu0 %v250
      %296 = vmatprep.subr.mxu0 0.0
      %297 = vmatpush1.xpose.msra.mxu0 %v253
      %298 = vmatprep.subr.mxu0 0.0
      %299 = vmatpush1.xpose.msra.mxu0 %v256
      %300 = vmatprep.subr.mxu0 0.0
      %301 = vmatpush1.xpose.msra.mxu0 %v259
      %302 = vmatprep.subr.mxu0 0.0
      %303 = vmatpush1.xpose.msra.mxu0 %v262
      %304 = vmatprep.subr.mxu0 0.0
      %305 = vmatpush1.xpose.msra.mxu0 %v265
      %306 = vmatprep.subr.mxu0 0.0
      %307 = vmatpush1.xpose.msra.mxu0 %v268
      %308 = vmatprep.subr.mxu0 0.0
      %309 = vmatpush1.xpose.msra.mxu0 %v271
      %310 = vmatprep.subr.mxu0 0.0
      %311 = vmatpush1.xpose.msra.mxu0 %v274
      %312 = vmatprep.subr.mxu0 0.0
      %313 = vmatpush1.xpose.msra.mxu0 %v277
      %314 = vmatprep.subr.mxu0 0.0
      %315 = vmatpush1.xpose.msra.mxu0 %v280
      %316 = vmatprep.subr.mxu0 0.0
      %317 = vmatpush1.xpose.msra.mxu0 %v283
      %318 = vmatprep.subr.mxu0 0.0
      %319 = vmatpush1.xpose.msra.mxu0 %v286
      %320 = vmatprep.subr.mxu0 0.0
      %321 = vmatpush1.xpose.msra.mxu0 0.0
      %322 = vmatprep.subr.mxu0 0.0
      %323 = vmatpush1.xpose.msra.mxu0 0.0
      %324 = vmatprep.subr.mxu0 0.0
      %325 = vmatpush1.xpose.msra.mxu0 0.0
      %326 = vmatprep.subr.mxu0 0.0
      %327 = vmatpush1.xpose.msra.mxu0 0.0
      %328 = vmatprep.subr.mxu0 0.0
      %329 = vmatpush1.xpose.msra.mxu0 0.0
      %330 = vmatprep.subr.mxu0 0.0
      %331 = vmatpush1.xpose.msra.mxu0 0.0
      %332 = vmatprep.subr.mxu0 0.0
      %333 = vmatpush1.xpose.msra.mxu0 0.0
      %334 = vmatprep.subr.mxu0 0.0
      %335 = vmatpush1.xpose.msra.mxu0 0.0
      %336 = vmatprep.subr.mxu0 0.0
      %337 = vmatpush1.xpose.msra.mxu0 0.0
      %338 = vmatprep.subr.mxu0 0.0
      %339 = vmatpush1.xpose.msra.mxu0 0.0
      %340 = vmatprep.subr.mxu0 0.0
      %341 = vmatpush1.xpose.msra.mxu0 0.0
      %342 = vmatprep.subr.mxu0 0.0
      %343 = vmatpush1.xpose.msra.mxu0 0.0
      %344 = vmatprep.subr.mxu0 0.0
      %345 = vmatpush1.xpose.msra.mxu0 0.0
      %346 = vmatprep.subr.mxu0 0.0
      %347 = vmatpush1.xpose.msra.mxu0 0.0
      %348 = vmatprep.subr.mxu0 0.0
      %349 = vmatpush1.xpose.msra.mxu0 0.0
      %350 = vmatprep.subr.mxu0 0.0
      %351 = vmatpush1.xpose.msra.mxu0 0.0
      %352 = vmatprep.mubr.f32.mxu0 0.0
      %353 = vmatmul.mubr.f32.gmra.mrb[0].mxu0 %v193
      %v354 = vpop.f32.mrb[0].mxu0
      %v355 = vadd.f32 0.0, %v354
      %v356 = vpop.f32.mrb[0].mxu0
      %357 = vmatprep.mubr.f32.mxu0 0.0
      %358 = vmatmul.mubr.f32.gmra.mrb[0].mxu0 %v196
      %v359 = vpop.f32.mrb[0].mxu0
      %v360 = vadd.f32 0.0, %v359
      %v361 = vpop.f32.mrb[0].mxu0
      %362 = vmatprep.mubr.f32.mxu0 0.0
      %363 = vmatmul.mubr.f32.gmra.mrb[0].mxu0 %v199
      %v364 = vpop.f32.mrb[0].mxu0
      %v365 = vadd.f32 0.0, %v364
      %v366 = vpop.f32.mrb[0].mxu0
      %367 = vmatprep.mubr.f32.mxu0 0.0
      %368 = vmatmul.mubr.f32.gmra.mrb[0].mxu0 %v202
      %v369 = vpop.f32.mrb[0].mxu0
      %v370 = vadd.f32 0.0, %v369
      %v371 = vpop.f32.mrb[0].mxu0
      %372 = vmatprep.mubr.f32.mxu0 0.0
      %373 = vmatmul.mubr.f32.gmra.mrb[0].mxu0 %v205
      %v374 = vpop.f32.mrb[0].mxu0
      %v375 = vadd.f32 0.0, %v374
      %v376 = vpop.f32.mrb[0].mxu0
      %377 = vmatprep.mubr.f32.mxu0 0.0
      %378 = vmatmul.mubr.f32.gmra.mrb[0].mxu0 %v208
      %v379 = vpop.f32.mrb[0].mxu0
      %v380 = vadd.f32 0.0, %v379
      %v381 = vpop.f32.mrb[0].mxu0
      %382 = vmatprep.mubr.f32.mxu0 0.0
      %383 = vmatmul.mubr.f32.gmra.mrb[0].mxu0 %v211
      %v384 = vpop.f32.mrb[0].mxu0
      %v385 = vadd.f32 0.0, %v384
      %v386 = vpop.f32.mrb[0].mxu0
      %387 = vmatprep.mubr.f32.mxu0 0.0
      %388 = vmatmul.mubr.f32.gmra.mrb[0].mxu0 %v214
      %v389 = vpop.f32.mrb[0].mxu0
      %v390 = vadd.f32 0.0, %v389
      %v391 = vpop.f32.mrb[0].mxu0
      %392 = vmatprep.mubr.f32.mxu0 0.0
      %393 = vmatmul.mubr.f32.gmra.mrb[0].mxu0 %v217
      %v394 = vpop.f32.mrb[0].mxu0
      %v395 = vadd.f32 0.0, %v394
      %v396 = vpop.f32.mrb[0].mxu0
      %397 = vmatprep.mubr.f32.mxu0 0.0
      %398 = vmatmul.mubr.f32.gmra.mrb[0].mxu0 %v220
      %v399 = vpop.f32.mrb[0].mxu0
      %v400 = vadd.f32 0.0, %v399
      %v401 = vpop.f32.mrb[0].mxu0
      %402 = vmatprep.mubr.f32.mxu0 0.0
      %403 = vmatmul.mubr.f32.gmra.mrb[0].mxu0 %v223
      %v404 = vpop.f32.mrb[0].mxu0
      %v405 = vadd.f32 0.0, %v404
      %v406 = vpop.f32.mrb[0].mxu0
      %407 = vmatprep.mubr.f32.mxu0 0.0
      %408 = vmatmul.mubr.f32.gmra.mrb[0].mxu0 %v226
      %v409 = vpop.f32.mrb[0].mxu0
      %v410 = vadd.f32 0.0, %v409
      %v411 = vpop.f32.mrb[0].mxu0
      %412 = vmatprep.mubr.f32.mxu0 0.0
      %413 = vmatmul.mubr.f32.gmra.mrb[0].mxu0 %v229
      %v414 = vpop.f32.mrb[0].mxu0
      %v415 = vadd.f32 0.0, %v414
      %v416 = vpop.f32.mrb[0].mxu0
      %417 = vmatprep.mubr.f32.mxu0 0.0
      %418 = vmatmul.mubr.f32.gmra.mrb[0].mxu0 %v232
      %v419 = vpop.f32.mrb[0].mxu0
      %v420 = vadd.f32 0.0, %v419
      %v421 = vpop.f32.mrb[0].mxu0
      %422 = vmatprep.mubr.f32.mxu0 0.0
      %423 = vmatmul.mubr.f32.gmra.mrb[0].mxu0 %v235
      %v424 = vpop.f32.mrb[0].mxu0
      %v425 = vadd.f32 0.0, %v424
      %v426 = vpop.f32.mrb[0].mxu0
      %427 = vmatprep.mubr.f32.mxu0 0.0
      %428 = vmatmul.mubr.f32.gmra.mrb[0].mxu0 %v238
      %v429 = vpop.f32.mrb[0].mxu0
      %v430 = vadd.f32 0.0, %v429
      %v431 = vpop.f32.mrb[0].mxu0
      %432 = vdwg.mxu0
      %v434 = vsel %vm191, %v158, 0
      %v437 = vsel %vm191, %v159, 0
      %v440 = vsel %vm191, %v160, 0
      %v443 = vsel %vm191, %v161, 0
      %v446 = vsel %vm191, %v162, 0
      %v449 = vsel %vm191, %v163, 0
      %v452 = vsel %vm191, %v164, 0
      %v455 = vsel %vm191, %v165, 0
      %v458 = vsel %vm191, %v166, 0
      %v461 = vsel %vm191, %v167, 0
      %v464 = vsel %vm191, %v168, 0
      %v467 = vsel %vm191, %v169, 0
      %v470 = vsel %vm191, %v170, 0
      %v473 = vsel %vm191, %v171, 0
      %v476 = vsel %vm191, %v172, 0
      %v479 = vsel %vm191, %v173, 0
      %v482 = vsel %vm191, %v175, 0
      %v485 = vsel %vm191, %v176, 0
      %v488 = vsel %vm191, %v177, 0
      %v491 = vsel %vm191, %v178, 0
      %v494 = vsel %vm191, %v179, 0
      %v497 = vsel %vm191, %v180, 0
      %v500 = vsel %vm191, %v181, 0
      %v503 = vsel %vm191, %v182, 0
      %v506 = vsel %vm191, %v183, 0
      %v509 = vsel %vm191, %v184, 0
      %v512 = vsel %vm191, %v185, 0
      %v515 = vsel %vm191, %v186, 0
      %v518 = vsel %vm191, %v187, 0
      %v521 = vsel %vm191, %v188, 0
      %v524 = vsel %vm191, %v189, 0
      %v527 = vsel %vm191, %v190, 0
      %529 = vmatprep.subr.mxu0 0.0
      %530 = vmatpush1.xpose.msra.mxu0 %v482
      %531 = vmatprep.subr.mxu0 0.0
      %532 = vmatpush1.xpose.msra.mxu0 %v485
      %533 = vmatprep.subr.mxu0 0.0
      %534 = vmatpush1.xpose.msra.mxu0 %v488
      %535 = vmatprep.subr.mxu0 0.0
      %536 = vmatpush1.xpose.msra.mxu0 %v491
      %537 = vmatprep.subr.mxu0 0.0
      %538 = vmatpush1.xpose.msra.mxu0 %v494
      %539 = vmatprep.subr.mxu0 0.0
      %540 = vmatpush1.xpose.msra.mxu0 %v497
      %541 = vmatprep.subr.mxu0 0.0
      %542 = vmatpush1.xpose.msra.mxu0 %v500
      %543 = vmatprep.subr.mxu0 0.0
      %544 = vmatpush1.xpose.msra.mxu0 %v503
      %545 = vmatprep.subr.mxu0 0.0
      %546 = vmatpush1.xpose.msra.mxu0 %v506
      %547 = vmatprep.subr.mxu0 0.0
      %548 = vmatpush1.xpose.msra.mxu0 %v509
      %549 = vmatprep.subr.mxu0 0.0
      %550 = vmatpush1.xpose.msra.mxu0 %v512
      %551 = vmatprep.subr.mxu0 0.0
      %552 = vmatpush1.xpose.msra.mxu0 %v515
      %553 = vmatprep.subr.mxu0 0.0
      %554 = vmatpush1.xpose.msra.mxu0 %v518
      %555 = vmatprep.subr.mxu0 0.0
      %556 = vmatpush1.xpose.msra.mxu0 %v521
      %557 = vmatprep.subr.mxu0 0.0
      %558 = vmatpush1.xpose.msra.mxu0 %v524
      %559 = vmatprep.subr.mxu0 0.0
      %560 = vmatpush1.xpose.msra.mxu0 %v527
      %561 = vmatprep.subr.mxu0 0.0
      %562 = vmatpush1.xpose.msra.mxu0 0.0
      %563 = vmatprep.subr.mxu0 0.0
      %564 = vmatpush1.xpose.msra.mxu0 0.0
      %565 = vmatprep.subr.mxu0 0.0
      %566 = vmatpush1.xpose.msra.mxu0 0.0
      %567 = vmatprep.subr.mxu0 0.0
      %568 = vmatpush1.xpose.msra.mxu0 0.0
      %569 = vmatprep.subr.mxu0 0.0
      %570 = vmatpush1.xpose.msra.mxu0 0.0
      %571 = vmatprep.subr.mxu0 0.0
      %572 = vmatpush1.xpose.msra.mxu0 0.0
      %573 = vmatprep.subr.mxu0 0.0
      %574 = vmatpush1.xpose.msra.mxu0 0.0
      %575 = vmatprep.subr.mxu0 0.0
      %576 = vmatpush1.xpose.msra.mxu0 0.0
      %577 = vmatprep.subr.mxu0 0.0
      %578 = vmatpush1.xpose.msra.mxu0 0.0
      %579 = vmatprep.subr.mxu0 0.0
      %580 = vmatpush1.xpose.msra.mxu0 0.0
      %581 = vmatprep.subr.mxu0 0.0
      %582 = vmatpush1.xpose.msra.mxu0 0.0
      %583 = vmatprep.subr.mxu0 0.0
      %584 = vmatpush1.xpose.msra.mxu0 0.0
      %585 = vmatprep.subr.mxu0 0.0
      %586 = vmatpush1.xpose.msra.mxu0 0.0
      %587 = vmatprep.subr.mxu0 0.0
      %588 = vmatpush1.xpose.msra.mxu0 0.0
      %589 = vmatprep.subr.mxu0 0.0
      %590 = vmatpush1.xpose.msra.mxu0 0.0
      %591 = vmatprep.subr.mxu0 0.0
      %592 = vmatpush1.xpose.msra.mxu0 0.0
      %593 = vmatprep.mubr.f32.mxu0 0.0
      %594 = vmatmul.mubr.f32.gmra.mrb[0].mxu0 %v434
      %v595 = vpop.f32.mrb[0].mxu0
      %v596 = vadd.f32 0.0, %v595
      %v597 = vpop.f32.mrb[0].mxu0
      %598 = vmatprep.mubr.f32.mxu0 0.0
      %599 = vmatmul.mubr.f32.gmra.mrb[0].mxu0 %v437
      %v600 = vpop.f32.mrb[0].mxu0
      %v601 = vadd.f32 0.0, %v600
      %v602 = vpop.f32.mrb[0].mxu0
      %603 = vmatprep.mubr.f32.mxu0 0.0
      %604 = vmatmul.mubr.f32.gmra.mrb[0].mxu0 %v440
      %v605 = vpop.f32.mrb[0].mxu0
      %v606 = vadd.f32 0.0, %v605
      %v607 = vpop.f32.mrb[0].mxu0
      %608 = vmatprep.mubr.f32.mxu0 0.0
      %609 = vmatmul.mubr.f32.gmra.mrb[0].mxu0 %v443
      %v610 = vpop.f32.mrb[0].mxu0
      %v611 = vadd.f32 0.0, %v610
      %v612 = vpop.f32.mrb[0].mxu0
      %613 = vmatprep.mubr.f32.mxu0 0.0
      %614 = vmatmul.mubr.f32.gmra.mrb[0].mxu0 %v446
      %v615 = vpop.f32.mrb[0].mxu0
      %v616 = vadd.f32 0.0, %v615
      %v617 = vpop.f32.mrb[0].mxu0
      %618 = vmatprep.mubr.f32.mxu0 0.0
      %619 = vmatmul.mubr.f32.gmra.mrb[0].mxu0 %v449
      %v620 = vpop.f32.mrb[0].mxu0
      %v621 = vadd.f32 0.0, %v620
      %v622 = vpop.f32.mrb[0].mxu0
      %623 = vmatprep.mubr.f32.mxu0 0.0
      %624 = vmatmul.mubr.f32.gmra.mrb[0].mxu0 %v452
      %v625 = vpop.f32.mrb[0].mxu0
      %v626 = vadd.f32 0.0, %v625
      %v627 = vpop.f32.mrb[0].mxu0
      %628 = vmatprep.mubr.f32.mxu0 0.0
      %629 = vmatmul.mubr.f32.gmra.mrb[0].mxu0 %v455
      %v630 = vpop.f32.mrb[0].mxu0
      %v631 = vadd.f32 0.0, %v630
      %v632 = vpop.f32.mrb[0].mxu0
      %633 = vmatprep.mubr.f32.mxu0 0.0
      %634 = vmatmul.mubr.f32.gmra.mrb[0].mxu0 %v458
      %v635 = vpop.f32.mrb[0].mxu0
      %v636 = vadd.f32 0.0, %v635
      %v637 = vpop.f32.mrb[0].mxu0
      %638 = vmatprep.mubr.f32.mxu0 0.0
      %639 = vmatmul.mubr.f32.gmra.mrb[0].mxu0 %v461
      %v640 = vpop.f32.mrb[0].mxu0
      %v641 = vadd.f32 0.0, %v640
      %v642 = vpop.f32.mrb[0].mxu0
      %643 = vmatprep.mubr.f32.mxu0 0.0
      %644 = vmatmul.mubr.f32.gmra.mrb[0].mxu0 %v464
      %v645 = vpop.f32.mrb[0].mxu0
      %v646 = vadd.f32 0.0, %v645
      %v647 = vpop.f32.mrb[0].mxu0
      %648 = vmatprep.mubr.f32.mxu0 0.0
      %649 = vmatmul.mubr.f32.gmra.mrb[0].mxu0 %v467
      %v650 = vpop.f32.mrb[0].mxu0
      %v651 = vadd.f32 0.0, %v650
      %v652 = vpop.f32.mrb[0].mxu0
      %653 = vmatprep.mubr.f32.mxu0 0.0
      %654 = vmatmul.mubr.f32.gmra.mrb[0].mxu0 %v470
      %v655 = vpop.f32.mrb[0].mxu0
      %v656 = vadd.f32 0.0, %v655
      %v657 = vpop.f32.mrb[0].mxu0
      %658 = vmatprep.mubr.f32.mxu0 0.0
      %659 = vmatmul.mubr.f32.gmra.mrb[0].mxu0 %v473
      %v660 = vpop.f32.mrb[0].mxu0
      %v661 = vadd.f32 0.0, %v660
      %v662 = vpop.f32.mrb[0].mxu0
      %663 = vmatprep.mubr.f32.mxu0 0.0
      %664 = vmatmul.mubr.f32.gmra.mrb[0].mxu0 %v476
      %v665 = vpop.f32.mrb[0].mxu0
      %v666 = vadd.f32 0.0, %v665
      %v667 = vpop.f32.mrb[0].mxu0
      %668 = vmatprep.mubr.f32.mxu0 0.0
      %669 = vmatmul.mubr.f32.gmra.mrb[0].mxu0 %v479
      %v670 = vpop.f32.mrb[0].mxu0
      %v671 = vadd.f32 0.0, %v670
      %v672 = vpop.f32.mrb[0].mxu0
      %673 = vdwg.mxu0
      %v674 = vmax.f32 %v355, 0.0
      %v675 = vmax.f32 %v360, 0.0
      %v676 = vmax.f32 %v365, 0.0
      %v677 = vmax.f32 %v370, 0.0
      %v678 = vmax.f32 %v375, 0.0
      %v679 = vmax.f32 %v380, 0.0
      %v680 = vmax.f32 %v385, 0.0
      %v681 = vmax.f32 %v390, 0.0
      %v682 = vmax.f32 %v395, 0.0
      %v683 = vmax.f32 %v400, 0.0
      %v684 = vmax.f32 %v405, 0.0
      %v685 = vmax.f32 %v410, 0.0
      %v686 = vmax.f32 %v415, 0.0
      %v687 = vmax.f32 %v420, 0.0
      %v688 = vmax.f32 %v425, 0.0
      %v689 = vmax.f32 %v430, 0.0
      %v690 = vrsqrt.pop %v674
      %v691 = vmul.f32 %v674, %v690
      %vm692 = vcmp.eq.f32.partialorder %v674, inf
      %v693 = vsel %vm692, %v674, %v691
      %vm694 = vcmp.eq.f32.partialorder %v674, 0.0
      %v695 = vand.u32 %v674, 2147483648
      %v696 = vsel %vm694, %v695, %v693
      %v697 = vrsqrt.pop %v675
      %v698 = vmul.f32 %v675, %v697
      %vm699 = vcmp.eq.f32.partialorder %v675, inf
      %v700 = vsel %vm699, %v675, %v698
      %vm701 = vcmp.eq.f32.partialorder %v675, 0.0
      %v702 = vand.u32 %v675, 2147483648
      %v703 = vsel %vm701, %v702, %v700
      %v704 = vrsqrt.pop %v676
      %v705 = vmul.f32 %v676, %v704
      %vm706 = vcmp.eq.f32.partialorder %v676, inf
      %v707 = vsel %vm706, %v676, %v705
      %vm708 = vcmp.eq.f32.partialorder %v676, 0.0
      %v709 = vand.u32 %v676, 2147483648
      %v710 = vsel %vm708, %v709, %v707
      %v711 = vrsqrt.pop %v677
      %v712 = vmul.f32 %v677, %v711
      %vm713 = vcmp.eq.f32.partialorder %v677, inf
      %v714 = vsel %vm713, %v677, %v712
      %vm715 = vcmp.eq.f32.partialorder %v677, 0.0
      %v716 = vand.u32 %v677, 2147483648
      %v717 = vsel %vm715, %v716, %v714
      %v718 = vrsqrt.pop %v678
      %v719 = vmul.f32 %v678, %v718
      %vm720 = vcmp.eq.f32.partialorder %v678, inf
      %v721 = vsel %vm720, %v678, %v719
      %vm722 = vcmp.eq.f32.partialorder %v678, 0.0
      %v723 = vand.u32 %v678, 2147483648
      %v724 = vsel %vm722, %v723, %v721
      %v725 = vrsqrt.pop %v679
      %v726 = vmul.f32 %v679, %v725
      %vm727 = vcmp.eq.f32.partialorder %v679, inf
      %v728 = vsel %vm727, %v679, %v726
      %vm729 = vcmp.eq.f32.partialorder %v679, 0.0
      %v730 = vand.u32 %v679, 2147483648
      %v731 = vsel %vm729, %v730, %v728
      %v732 = vrsqrt.pop %v680
      %v733 = vmul.f32 %v680, %v732
      %vm734 = vcmp.eq.f32.partialorder %v680, inf
      %v735 = vsel %vm734, %v680, %v733
      %vm736 = vcmp.eq.f32.partialorder %v680, 0.0
      %v737 = vand.u32 %v680, 2147483648
      %v738 = vsel %vm736, %v737, %v735
      %v739 = vrsqrt.pop %v681
      %v740 = vmul.f32 %v681, %v739
      %vm741 = vcmp.eq.f32.partialorder %v681, inf
      %v742 = vsel %vm741, %v681, %v740
      %vm743 = vcmp.eq.f32.partialorder %v681, 0.0
      %v744 = vand.u32 %v681, 2147483648
      %v745 = vsel %vm743, %v744, %v742
      %v746 = vrsqrt.pop %v682
      %v747 = vmul.f32 %v682, %v746
      %vm748 = vcmp.eq.f32.partialorder %v682, inf
      %v749 = vsel %vm748, %v682, %v747
      %vm750 = vcmp.eq.f32.partialorder %v682, 0.0
      %v751 = vand.u32 %v682, 2147483648
      %v752 = vsel %vm750, %v751, %v749
      %v753 = vrsqrt.pop %v683
      %v754 = vmul.f32 %v683, %v753
      %vm755 = vcmp.eq.f32.partialorder %v683, inf
      %v756 = vsel %vm755, %v683, %v754
      %vm757 = vcmp.eq.f32.partialorder %v683, 0.0
      %v758 = vand.u32 %v683, 2147483648
      %v759 = vsel %vm757, %v758, %v756
      %v760 = vrsqrt.pop %v684
      %v761 = vmul.f32 %v684, %v760
      %vm762 = vcmp.eq.f32.partialorder %v684, inf
      %v763 = vsel %vm762, %v684, %v761
      %vm764 = vcmp.eq.f32.partialorder %v684, 0.0
      %v765 = vand.u32 %v684, 2147483648
      %v766 = vsel %vm764, %v765, %v763
      %v767 = vrsqrt.pop %v685
      %v768 = vmul.f32 %v685, %v767
      %vm769 = vcmp.eq.f32.partialorder %v685, inf
      %v770 = vsel %vm769, %v685, %v768
      %vm771 = vcmp.eq.f32.partialorder %v685, 0.0
      %v772 = vand.u32 %v685, 2147483648
      %v773 = vsel %vm771, %v772, %v770
      %v774 = vrsqrt.pop %v686
      %v775 = vmul.f32 %v686, %v774
      %vm776 = vcmp.eq.f32.partialorder %v686, inf
      %v777 = vsel %vm776, %v686, %v775
      %vm778 = vcmp.eq.f32.partialorder %v686, 0.0
      %v779 = vand.u32 %v686, 2147483648
      %v780 = vsel %vm778, %v779, %v777
      %v781 = vrsqrt.pop %v687
      %v782 = vmul.f32 %v687, %v781
      %vm783 = vcmp.eq.f32.partialorder %v687, inf
      %v784 = vsel %vm783, %v687, %v782
      %vm785 = vcmp.eq.f32.partialorder %v687, 0.0
      %v786 = vand.u32 %v687, 2147483648
      %v787 = vsel %vm785, %v786, %v784
      %v788 = vrsqrt.pop %v688
      %v789 = vmul.f32 %v688, %v788
      %vm790 = vcmp.eq.f32.partialorder %v688, inf
      %v791 = vsel %vm790, %v688, %v789
      %vm792 = vcmp.eq.f32.partialorder %v688, 0.0
      %v793 = vand.u32 %v688, 2147483648
      %v794 = vsel %vm792, %v793, %v791
      %v795 = vrsqrt.pop %v689
      %v796 = vmul.f32 %v689, %v795
      %vm797 = vcmp.eq.f32.partialorder %v689, inf
      %v798 = vsel %vm797, %v689, %v796
      %vm799 = vcmp.eq.f32.partialorder %v689, 0.0
      %v800 = vand.u32 %v689, 2147483648
      %v801 = vsel %vm799, %v800, %v798
      %v802 = vmax.f32 %v596, 0.0
      %v803 = vmax.f32 %v601, 0.0
      %v804 = vmax.f32 %v606, 0.0
      %v805 = vmax.f32 %v611, 0.0
      %v806 = vmax.f32 %v616, 0.0
      %v807 = vmax.f32 %v621, 0.0
      %v808 = vmax.f32 %v626, 0.0
      %v809 = vmax.f32 %v631, 0.0
      %v810 = vmax.f32 %v636, 0.0
      %v811 = vmax.f32 %v641, 0.0
      %v812 = vmax.f32 %v646, 0.0
      %v813 = vmax.f32 %v651, 0.0
      %v814 = vmax.f32 %v656, 0.0
      %v815 = vmax.f32 %v661, 0.0
      %v816 = vmax.f32 %v666, 0.0
      %v817 = vmax.f32 %v671, 0.0
      %v818 = vrsqrt.pop %v802
      %v819 = vmul.f32 %v802, %v818
      %vm820 = vcmp.eq.f32.partialorder %v802, inf
      %v821 = vsel %vm820, %v802, %v819
      %vm822 = vcmp.eq.f32.partialorder %v802, 0.0
      %v823 = vand.u32 %v802, 2147483648
      %v824 = vsel %vm822, %v823, %v821
      %v825 = vrsqrt.pop %v803
      %v826 = vmul.f32 %v803, %v825
      %vm827 = vcmp.eq.f32.partialorder %v803, inf
      %v828 = vsel %vm827, %v803, %v826
      %vm829 = vcmp.eq.f32.partialorder %v803, 0.0
      %v830 = vand.u32 %v803, 2147483648
      %v831 = vsel %vm829, %v830, %v828
      %v832 = vrsqrt.pop %v804
      %v833 = vmul.f32 %v804, %v832
      %vm834 = vcmp.eq.f32.partialorder %v804, inf
      %v835 = vsel %vm834, %v804, %v833
      %vm836 = vcmp.eq.f32.partialorder %v804, 0.0
      %v837 = vand.u32 %v804, 2147483648
      %v838 = vsel %vm836, %v837, %v835
      %v839 = vrsqrt.pop %v805
      %v840 = vmul.f32 %v805, %v839
      %vm841 = vcmp.eq.f32.partialorder %v805, inf
      %v842 = vsel %vm841, %v805, %v840
      %vm843 = vcmp.eq.f32.partialorder %v805, 0.0
      %v844 = vand.u32 %v805, 2147483648
      %v845 = vsel %vm843, %v844, %v842
      %v846 = vrsqrt.pop %v806
      %v847 = vmul.f32 %v806, %v846
      %vm848 = vcmp.eq.f32.partialorder %v806, inf
      %v849 = vsel %vm848, %v806, %v847
      %vm850 = vcmp.eq.f32.partialorder %v806, 0.0
      %v851 = vand.u32 %v806, 2147483648
      %v852 = vsel %vm850, %v851, %v849
      %v853 = vrsqrt.pop %v807
      %v854 = vmul.f32 %v807, %v853
      %vm855 = vcmp.eq.f32.partialorder %v807, inf
      %v856 = vsel %vm855, %v807, %v854
      %vm857 = vcmp.eq.f32.partialorder %v807, 0.0
      %v858 = vand.u32 %v807, 2147483648
      %v859 = vsel %vm857, %v858, %v856
      %v860 = vrsqrt.pop %v808
      %v861 = vmul.f32 %v808, %v860
      %vm862 = vcmp.eq.f32.partialorder %v808, inf
      %v863 = vsel %vm862, %v808, %v861
      %vm864 = vcmp.eq.f32.partialorder %v808, 0.0
      %v865 = vand.u32 %v808, 2147483648
      %v866 = vsel %vm864, %v865, %v863
      %v867 = vrsqrt.pop %v809
      %v868 = vmul.f32 %v809, %v867
      %vm869 = vcmp.eq.f32.partialorder %v809, inf
      %v870 = vsel %vm869, %v809, %v868
      %vm871 = vcmp.eq.f32.partialorder %v809, 0.0
      %v872 = vand.u32 %v809, 2147483648
      %v873 = vsel %vm871, %v872, %v870
      %v874 = vrsqrt.pop %v810
      %v875 = vmul.f32 %v810, %v874
      %vm876 = vcmp.eq.f32.partialorder %v810, inf
      %v877 = vsel %vm876, %v810, %v875
      %vm878 = vcmp.eq.f32.partialorder %v810, 0.0
      %v879 = vand.u32 %v810, 2147483648
      %v880 = vsel %vm878, %v879, %v877
      %v881 = vrsqrt.pop %v811
      %v882 = vmul.f32 %v811, %v881
      %vm883 = vcmp.eq.f32.partialorder %v811, inf
      %v884 = vsel %vm883, %v811, %v882
      %vm885 = vcmp.eq.f32.partialorder %v811, 0.0
      %v886 = vand.u32 %v811, 2147483648
      %v887 = vsel %vm885, %v886, %v884
      %v888 = vrsqrt.pop %v812
      %v889 = vmul.f32 %v812, %v888
      %vm890 = vcmp.eq.f32.partialorder %v812, inf
      %v891 = vsel %vm890, %v812, %v889
      %vm892 = vcmp.eq.f32.partialorder %v812, 0.0
      %v893 = vand.u32 %v812, 2147483648
      %v894 = vsel %vm892, %v893, %v891
      %v895 = vrsqrt.pop %v813
      %v896 = vmul.f32 %v813, %v895
      %vm897 = vcmp.eq.f32.partialorder %v813, inf
      %v898 = vsel %vm897, %v813, %v896
      %vm899 = vcmp.eq.f32.partialorder %v813, 0.0
      %v900 = vand.u32 %v813, 2147483648
      %v901 = vsel %vm899, %v900, %v898
      %v902 = vrsqrt.pop %v814
      %v903 = vmul.f32 %v814, %v902
      %vm904 = vcmp.eq.f32.partialorder %v814, inf
      %v905 = vsel %vm904, %v814, %v903
      %vm906 = vcmp.eq.f32.partialorder %v814, 0.0
      %v907 = vand.u32 %v814, 2147483648
      %v908 = vsel %vm906, %v907, %v905
      %v909 = vrsqrt.pop %v815
      %v910 = vmul.f32 %v815, %v909
      %vm911 = vcmp.eq.f32.partialorder %v815, inf
      %v912 = vsel %vm911, %v815, %v910
      %vm913 = vcmp.eq.f32.partialorder %v815, 0.0
      %v914 = vand.u32 %v815, 2147483648
      %v915 = vsel %vm913, %v914, %v912
      %v916 = vrsqrt.pop %v816
      %v917 = vmul.f32 %v816, %v916
      %vm918 = vcmp.eq.f32.partialorder %v816, inf
      %v919 = vsel %vm918, %v816, %v917
      %vm920 = vcmp.eq.f32.partialorder %v816, 0.0
      %v921 = vand.u32 %v816, 2147483648
      %v922 = vsel %vm920, %v921, %v919
      %v923 = vrsqrt.pop %v817
      %v924 = vmul.f32 %v817, %v923
      %vm925 = vcmp.eq.f32.partialorder %v817, inf
      %v926 = vsel %vm925, %v817, %v924
      %vm927 = vcmp.eq.f32.partialorder %v817, 0.0
      %v928 = vand.u32 %v817, 2147483648
      %v929 = vsel %vm927, %v928, %v926
      %v930 = vadd.f32 %v696, %v824
      %v931 = vadd.f32 %v703, %v831
      %v932 = vadd.f32 %v710, %v838
      %v933 = vadd.f32 %v717, %v845
      %v934 = vadd.f32 %v724, %v852
      %v935 = vadd.f32 %v731, %v859
      %v936 = vadd.f32 %v738, %v866
      %v937 = vadd.f32 %v745, %v873
      %v938 = vadd.f32 %v752, %v880
      %v939 = vadd.f32 %v759, %v887
      %v940 = vadd.f32 %v766, %v894
      %v941 = vadd.f32 %v773, %v901
      %v942 = vadd.f32 %v780, %v908
      %v943 = vadd.f32 %v787, %v915
      %v944 = vadd.f32 %v794, %v922
      %v945 = vadd.f32 %v801, %v929
      %v946 = vmul.f32 %v930, 0.5
      %v947 = vmul.f32 %v931, 0.5
      %v948 = vmul.f32 %v932, 0.5
      %v949 = vmul.f32 %v933, 0.5
      %v950 = vmul.f32 %v934, 0.5
      %v951 = vmul.f32 %v935, 0.5
      %v952 = vmul.f32 %v936, 0.5
      %v953 = vmul.f32 %v937, 0.5
      %v954 = vmul.f32 %v938, 0.5
      %v955 = vmul.f32 %v939, 0.5
      %v956 = vmul.f32 %v940, 0.5
      %v957 = vmul.f32 %v941, 0.5
      %v958 = vmul.f32 %v942, 0.5
      %v959 = vmul.f32 %v943, 0.5
      %v960 = vmul.f32 %v944, 0.5
      %v961 = vmul.f32 %v945, 0.5
      %v962 = vmax.f32 %v946, 1e-36
      %v963 = vmax.f32 %v947, 1e-36
      %v964 = vmax.f32 %v948, 1e-36
      %v965 = vmax.f32 %v949, 1e-36
      %v966 = vmax.f32 %v950, 1e-36
      %v967 = vmax.f32 %v951, 1e-36
      %v968 = vmax.f32 %v952, 1e-36
      %v969 = vmax.f32 %v953, 1e-36
      %v970 = vmax.f32 %v954, 1e-36
      %v971 = vmax.f32 %v955, 1e-36
      %v972 = vmax.f32 %v956, 1e-36
      %v973 = vmax.f32 %v957, 1e-36
      %v974 = vmax.f32 %v958, 1e-36
      %v975 = vmax.f32 %v959, 1e-36
      %v976 = vmax.f32 %v960, 1e-36
      %v977 = vmax.f32 %v961, 1e-36
      %v978 = vrsqrt.pop %v962
      %v979 = vmul.f32 %v962, %v978
      %vm980 = vcmp.eq.f32.partialorder %v962, inf
      %v981 = vsel %vm980, %v962, %v979
      %vm982 = vcmp.eq.f32.partialorder %v962, 0.0
      %v983 = vand.u32 %v962, 2147483648
      %v984 = vsel %vm982, %v983, %v981
      %v985 = vrsqrt.pop %v963
      %v986 = vmul.f32 %v963, %v985
      %vm987 = vcmp.eq.f32.partialorder %v963, inf
      %v988 = vsel %vm987, %v963, %v986
      %vm989 = vcmp.eq.f32.partialorder %v963, 0.0
      %v990 = vand.u32 %v963, 2147483648
      %v991 = vsel %vm989, %v990, %v988
      %v992 = vrsqrt.pop %v964
      %v993 = vmul.f32 %v964, %v992
      %vm994 = vcmp.eq.f32.partialorder %v964, inf
      %v995 = vsel %vm994, %v964, %v993
      %vm996 = vcmp.eq.f32.partialorder %v964, 0.0
      %v997 = vand.u32 %v964, 2147483648
      %v998 = vsel %vm996, %v997, %v995
      %v999 = vrsqrt.pop %v965
      %v1000 = vmul.f32 %v965, %v999
      %vm1001 = vcmp.eq.f32.partialorder %v965, inf
      %v1002 = vsel %vm1001, %v965, %v1000
      %vm1003 = vcmp.eq.f32.partialorder %v965, 0.0
      %v1004 = vand.u32 %v965, 2147483648
      %v1005 = vsel %vm1003, %v1004, %v1002
      %v1006 = vrsqrt.pop %v966
      %v1007 = vmul.f32 %v966, %v1006
      %vm1008 = vcmp.eq.f32.partialorder %v966, inf
      %v1009 = vsel %vm1008, %v966, %v1007
      %vm1010 = vcmp.eq.f32.partialorder %v966, 0.0
      %v1011 = vand.u32 %v966, 2147483648
      %v1012 = vsel %vm1010, %v1011, %v1009
      %v1013 = vrsqrt.pop %v967
      %v1014 = vmul.f32 %v967, %v1013
      %vm1015 = vcmp.eq.f32.partialorder %v967, inf
      %v1016 = vsel %vm1015, %v967, %v1014
      %vm1017 = vcmp.eq.f32.partialorder %v967, 0.0
      %v1018 = vand.u32 %v967, 2147483648
      %v1019 = vsel %vm1017, %v1018, %v1016
      %v1020 = vrsqrt.pop %v968
      %v1021 = vmul.f32 %v968, %v1020
      %vm1022 = vcmp.eq.f32.partialorder %v968, inf
      %v1023 = vsel %vm1022, %v968, %v1021
      %vm1024 = vcmp.eq.f32.partialorder %v968, 0.0
      %v1025 = vand.u32 %v968, 2147483648
      %v1026 = vsel %vm1024, %v1025, %v1023
      %v1027 = vrsqrt.pop %v969
      %v1028 = vmul.f32 %v969, %v1027
      %vm1029 = vcmp.eq.f32.partialorder %v969, inf
      %v1030 = vsel %vm1029, %v969, %v1028
      %vm1031 = vcmp.eq.f32.partialorder %v969, 0.0
      %v1032 = vand.u32 %v969, 2147483648
      %v1033 = vsel %vm1031, %v1032, %v1030
      %v1034 = vrsqrt.pop %v970
      %v1035 = vmul.f32 %v970, %v1034
      %vm1036 = vcmp.eq.f32.partialorder %v970, inf
      %v1037 = vsel %vm1036, %v970, %v1035
      %vm1038 = vcmp.eq.f32.partialorder %v970, 0.0
      %v1039 = vand.u32 %v970, 2147483648
      %v1040 = vsel %vm1038, %v1039, %v1037
      %v1041 = vrsqrt.pop %v971
      %v1042 = vmul.f32 %v971, %v1041
      %vm1043 = vcmp.eq.f32.partialorder %v971, inf
      %v1044 = vsel %vm1043, %v971, %v1042
      %vm1045 = vcmp.eq.f32.partialorder %v971, 0.0
      %v1046 = vand.u32 %v971, 2147483648
      %v1047 = vsel %vm1045, %v1046, %v1044
      %v1048 = vrsqrt.pop %v972
      %v1049 = vmul.f32 %v972, %v1048
      %vm1050 = vcmp.eq.f32.partialorder %v972, inf
      %v1051 = vsel %vm1050, %v972, %v1049
      %vm1052 = vcmp.eq.f32.partialorder %v972, 0.0
      %v1053 = vand.u32 %v972, 2147483648
      %v1054 = vsel %vm1052, %v1053, %v1051
      %v1055 = vrsqrt.pop %v973
      %v1056 = vmul.f32 %v973, %v1055
      %vm1057 = vcmp.eq.f32.partialorder %v973, inf
      %v1058 = vsel %vm1057, %v973, %v1056
      %vm1059 = vcmp.eq.f32.partialorder %v973, 0.0
      %v1060 = vand.u32 %v973, 2147483648
      %v1061 = vsel %vm1059, %v1060, %v1058
      %v1062 = vrsqrt.pop %v974
      %v1063 = vmul.f32 %v974, %v1062
      %vm1064 = vcmp.eq.f32.partialorder %v974, inf
      %v1065 = vsel %vm1064, %v974, %v1063
      %vm1066 = vcmp.eq.f32.partialorder %v974, 0.0
      %v1067 = vand.u32 %v974, 2147483648
      %v1068 = vsel %vm1066, %v1067, %v1065
      %v1069 = vrsqrt.pop %v975
      %v1070 = vmul.f32 %v975, %v1069
      %vm1071 = vcmp.eq.f32.partialorder %v975, inf
      %v1072 = vsel %vm1071, %v975, %v1070
      %vm1073 = vcmp.eq.f32.partialorder %v975, 0.0
      %v1074 = vand.u32 %v975, 2147483648
      %v1075 = vsel %vm1073, %v1074, %v1072
      %v1076 = vrsqrt.pop %v976
      %v1077 = vmul.f32 %v976, %v1076
      %vm1078 = vcmp.eq.f32.partialorder %v976, inf
      %v1079 = vsel %vm1078, %v976, %v1077
      %vm1080 = vcmp.eq.f32.partialorder %v976, 0.0
      %v1081 = vand.u32 %v976, 2147483648
      %v1082 = vsel %vm1080, %v1081, %v1079
      %v1083 = vrsqrt.pop %v977
      %v1084 = vmul.f32 %v977, %v1083
      %vm1085 = vcmp.eq.f32.partialorder %v977, inf
      %v1086 = vsel %vm1085, %v977, %v1084
      %vm1087 = vcmp.eq.f32.partialorder %v977, 0.0
      %v1088 = vand.u32 %v977, 2147483648
      %v1089 = vsel %vm1087, %v1088, %v1086
      %v1090 = vsub.f32 0.0, %v984
      %v1091 = vsub.f32 0.0, %v991
      %v1092 = vsub.f32 0.0, %v998
      %v1093 = vsub.f32 0.0, %v1005
      %v1094 = vsub.f32 0.0, %v1012
      %v1095 = vsub.f32 0.0, %v1019
      %v1096 = vsub.f32 0.0, %v1026
      %v1097 = vsub.f32 0.0, %v1033
      %v1098 = vsub.f32 0.0, %v1040
      %v1099 = vsub.f32 0.0, %v1047
      %v1100 = vsub.f32 0.0, %v1054
      %v1101 = vsub.f32 0.0, %v1061
      %v1102 = vsub.f32 0.0, %v1068
      %v1103 = vsub.f32 0.0, %v1075
      %v1104 = vsub.f32 0.0, %v1082
      %v1105 = vsub.f32 0.0, %v1089
      %v1106 = vmul.f32 %v1090, 1.442695
      %v1107 = vpow.pop %v1106
      %v1108 = vmul.f32 %v1091, 1.442695
      %v1109 = vpow.pop %v1108
      %v1110 = vmul.f32 %v1092, 1.442695
      %v1111 = vpow.pop %v1110
      %v1112 = vmul.f32 %v1093, 1.442695
      %v1113 = vpow.pop %v1112
      %v1114 = vmul.f32 %v1094, 1.442695
      %v1115 = vpow.pop %v1114
      %v1116 = vmul.f32 %v1095, 1.442695
      %v1117 = vpow.pop %v1116
      %v1118 = vmul.f32 %v1096, 1.442695
      %v1119 = vpow.pop %v1118
      %v1120 = vmul.f32 %v1097, 1.442695
      %v1121 = vpow.pop %v1120
      %v1122 = vmul.f32 %v1098, 1.442695
      %v1123 = vpow.pop %v1122
      %v1124 = vmul.f32 %v1099, 1.442695
      %v1125 = vpow.pop %v1124
      %v1126 = vmul.f32 %v1100, 1.442695
      %v1127 = vpow.pop %v1126
      %v1128 = vmul.f32 %v1101, 1.442695
      %v1129 = vpow.pop %v1128
      %v1130 = vmul.f32 %v1102, 1.442695
      %v1131 = vpow.pop %v1130
      %v1132 = vmul.f32 %v1103, 1.442695
      %v1133 = vpow.pop %v1132
      %v1134 = vmul.f32 %v1104, 1.442695
      %v1135 = vpow.pop %v1134
      %v1136 = vmul.f32 %v1105, 1.442695
      %v1137 = vpow.pop %v1136
      %v1138 = vlog2.pop %v962
      %v1139 = vmul.f32 %v1138, 0.6931472
      %v1140 = vlog2.pop %v963
      %v1141 = vmul.f32 %v1140, 0.6931472
      %v1142 = vlog2.pop %v964
      %v1143 = vmul.f32 %v1142, 0.6931472
      %v1144 = vlog2.pop %v965
      %v1145 = vmul.f32 %v1144, 0.6931472
      %v1146 = vlog2.pop %v966
      %v1147 = vmul.f32 %v1146, 0.6931472
      %v1148 = vlog2.pop %v967
      %v1149 = vmul.f32 %v1148, 0.6931472
      %v1150 = vlog2.pop %v968
      %v1151 = vmul.f32 %v1150, 0.6931472
      %v1152 = vlog2.pop %v969
      %v1153 = vmul.f32 %v1152, 0.6931472
      %v1154 = vlog2.pop %v970
      %v1155 = vmul.f32 %v1154, 0.6931472
      %v1156 = vlog2.pop %v971
      %v1157 = vmul.f32 %v1156, 0.6931472
      %v1158 = vlog2.pop %v972
      %v1159 = vmul.f32 %v1158, 0.6931472
      %v1160 = vlog2.pop %v973
      %v1161 = vmul.f32 %v1160, 0.6931472
      %v1162 = vlog2.pop %v974
      %v1163 = vmul.f32 %v1162, 0.6931472
      %v1164 = vlog2.pop %v975
      %v1165 = vmul.f32 %v1164, 0.6931472
      %v1166 = vlog2.pop %v976
      %v1167 = vmul.f32 %v1166, 0.6931472
      %v1168 = vlog2.pop %v977
      %v1169 = vmul.f32 %v1168, 0.6931472
      %v1170 = vmul.f32 %v1139, 0.8
      %v1171 = vmul.f32 %v1141, 0.8
      %v1172 = vmul.f32 %v1143, 0.8
      %v1173 = vmul.f32 %v1145, 0.8
      %v1174 = vmul.f32 %v1147, 0.8
      %v1175 = vmul.f32 %v1149, 0.8
      %v1176 = vmul.f32 %v1151, 0.8
      %v1177 = vmul.f32 %v1153, 0.8
      %v1178 = vmul.f32 %v1155, 0.8
      %v1179 = vmul.f32 %v1157, 0.8
      %v1180 = vmul.f32 %v1159, 0.8
      %v1181 = vmul.f32 %v1161, 0.8
      %v1182 = vmul.f32 %v1163, 0.8
      %v1183 = vmul.f32 %v1165, 0.8
      %v1184 = vmul.f32 %v1167, 0.8
      %v1185 = vmul.f32 %v1169, 0.8
      %v1186 = vadd.f32 %v1170, -0.55451775
      %v1187 = vadd.f32 %v1171, -0.55451775
      %v1188 = vadd.f32 %v1172, -0.55451775
      %v1189 = vadd.f32 %v1173, -0.55451775
      %v1190 = vadd.f32 %v1174, -0.55451775
      %v1191 = vadd.f32 %v1175, -0.55451775
      %v1192 = vadd.f32 %v1176, -0.55451775
      %v1193 = vadd.f32 %v1177, -0.55451775
      %v1194 = vadd.f32 %v1178, -0.55451775
      %v1195 = vadd.f32 %v1179, -0.55451775
      %v1196 = vadd.f32 %v1180, -0.55451775
      %v1197 = vadd.f32 %v1181, -0.55451775
      %v1198 = vadd.f32 %v1182, -0.55451775
      %v1199 = vadd.f32 %v1183, -0.55451775
      %v1200 = vadd.f32 %v1184, -0.55451775
      %v1201 = vadd.f32 %v1185, -0.55451775
      %v1202 = vmul.f32 %v1186, 1.442695
      %v1203 = vpow.pop %v1202
      %v1204 = vmul.f32 %v1187, 1.442695
      %v1205 = vpow.pop %v1204
      %v1206 = vmul.f32 %v1188, 1.442695
      %v1207 = vpow.pop %v1206
      %v1208 = vmul.f32 %v1189, 1.442695
      %v1209 = vpow.pop %v1208
      %v1210 = vmul.f32 %v1190, 1.442695
      %v1211 = vpow.pop %v1210
      %v1212 = vmul.f32 %v1191, 1.442695
      %v1213 = vpow.pop %v1212
      %v1214 = vmul.f32 %v1192, 1.442695
      %v1215 = vpow.pop %v1214
      %v1216 = vmul.f32 %v1193, 1.442695
      %v1217 = vpow.pop %v1216
      %v1218 = vmul.f32 %v1194, 1.442695
      %v1219 = vpow.pop %v1218
      %v1220 = vmul.f32 %v1195, 1.442695
      %v1221 = vpow.pop %v1220
      %v1222 = vmul.f32 %v1196, 1.442695
      %v1223 = vpow.pop %v1222
      %v1224 = vmul.f32 %v1197, 1.442695
      %v1225 = vpow.pop %v1224
      %v1226 = vmul.f32 %v1198, 1.442695
      %v1227 = vpow.pop %v1226
      %v1228 = vmul.f32 %v1199, 1.442695
      %v1229 = vpow.pop %v1228
      %v1230 = vmul.f32 %v1200, 1.442695
      %v1231 = vpow.pop %v1230
      %v1232 = vmul.f32 %v1201, 1.442695
      %v1233 = vpow.pop %v1232
      %v1234 = vsub.f32 0.0, %v1203
      %v1235 = vsub.f32 0.0, %v1205
      %v1236 = vsub.f32 0.0, %v1207
      %v1237 = vsub.f32 0.0, %v1209
      %v1238 = vsub.f32 0.0, %v1211
      %v1239 = vsub.f32 0.0, %v1213
      %v1240 = vsub.f32 0.0, %v1215
      %v1241 = vsub.f32 0.0, %v1217
      %v1242 = vsub.f32 0.0, %v1219
      %v1243 = vsub.f32 0.0, %v1221
      %v1244 = vsub.f32 0.0, %v1223
      %v1245 = vsub.f32 0.0, %v1225
      %v1246 = vsub.f32 0.0, %v1227
      %v1247 = vsub.f32 0.0, %v1229
      %v1248 = vsub.f32 0.0, %v1231
      %v1249 = vsub.f32 0.0, %v1233
      %v1250 = vmul.f32 %v1234, 1.442695
      %v1251 = vpow.pop %v1250
      %v1252 = vmul.f32 %v1235, 1.442695
      %v1253 = vpow.pop %v1252
      %v1254 = vmul.f32 %v1236, 1.442695
      %v1255 = vpow.pop %v1254
      %v1256 = vmul.f32 %v1237, 1.442695
      %v1257 = vpow.pop %v1256
      %v1258 = vmul.f32 %v1238, 1.442695
      %v1259 = vpow.pop %v1258
      %v1260 = vmul.f32 %v1239, 1.442695
      %v1261 = vpow.pop %v1260
      %v1262 = vmul.f32 %v1240, 1.442695
      %v1263 = vpow.pop %v1262
      %v1264 = vmul.f32 %v1241, 1.442695
      %v1265 = vpow.pop %v1264
      %v1266 = vmul.f32 %v1242, 1.442695
      %v1267 = vpow.pop %v1266
      %v1268 = vmul.f32 %v1243, 1.442695
      %v1269 = vpow.pop %v1268
      %v1270 = vmul.f32 %v1244, 1.442695
      %v1271 = vpow.pop %v1270
      %v1272 = vmul.f32 %v1245, 1.442695
      %v1273 = vpow.pop %v1272
      %v1274 = vmul.f32 %v1246, 1.442695
      %v1275 = vpow.pop %v1274
      %v1276 = vmul.f32 %v1247, 1.442695
      %v1277 = vpow.pop %v1276
      %v1278 = vmul.f32 %v1248, 1.442695
      %v1279 = vpow.pop %v1278
      %v1280 = vmul.f32 %v1249, 1.442695
      %v1281 = vpow.pop %v1280
      %v1282 = vadd.f32 %v1107, %v1251
      %v1283 = vadd.f32 %v1109, %v1253
      %v1284 = vadd.f32 %v1111, %v1255
      %v1285 = vadd.f32 %v1113, %v1257
      %v1286 = vadd.f32 %v1115, %v1259
      %v1287 = vadd.f32 %v1117, %v1261
      %v1288 = vadd.f32 %v1119, %v1263
      %v1289 = vadd.f32 %v1121, %v1265
      %v1290 = vadd.f32 %v1123, %v1267
      %v1291 = vadd.f32 %v1125, %v1269
      %v1292 = vadd.f32 %v1127, %v1271
      %v1293 = vadd.f32 %v1129, %v1273
      %v1294 = vadd.f32 %v1131, %v1275
      %v1295 = vadd.f32 %v1133, %v1277
      %v1296 = vadd.f32 %v1135, %v1279
      %v1297 = vadd.f32 %v1137, %v1281
      %v1298 = vmul.f32 %v962, 2.0
      %v1299 = vmul.f32 %v963, 2.0
      %v1300 = vmul.f32 %v964, 2.0
      %v1301 = vmul.f32 %v965, 2.0
      %v1302 = vmul.f32 %v966, 2.0
      %v1303 = vmul.f32 %v967, 2.0
      %v1304 = vmul.f32 %v968, 2.0
      %v1305 = vmul.f32 %v969, 2.0
      %v1306 = vmul.f32 %v970, 2.0
      %v1307 = vmul.f32 %v971, 2.0
      %v1308 = vmul.f32 %v972, 2.0
      %v1309 = vmul.f32 %v973, 2.0
      %v1310 = vmul.f32 %v974, 2.0
      %v1311 = vmul.f32 %v975, 2.0
      %v1312 = vmul.f32 %v976, 2.0
      %v1313 = vmul.f32 %v977, 2.0
      %v1314 = vsub.f32 0.0, %v1298
      %v1315 = vsub.f32 0.0, %v1299
      %v1316 = vsub.f32 0.0, %v1300
      %v1317 = vsub.f32 0.0, %v1301
      %v1318 = vsub.f32 0.0, %v1302
      %v1319 = vsub.f32 0.0, %v1303
      %v1320 = vsub.f32 0.0, %v1304
      %v1321 = vsub.f32 0.0, %v1305
      %v1322 = vsub.f32 0.0, %v1306
      %v1323 = vsub.f32 0.0, %v1307
      %v1324 = vsub.f32 0.0, %v1308
      %v1325 = vsub.f32 0.0, %v1309
      %v1326 = vsub.f32 0.0, %v1310
      %v1327 = vsub.f32 0.0, %v1311
      %v1328 = vsub.f32 0.0, %v1312
      %v1329 = vsub.f32 0.0, %v1313
      %v1330 = vmul.f32 %v1314, 1.442695
      %v1331 = vpow.pop %v1330
      %v1332 = vmul.f32 %v1315, 1.442695
      %v1333 = vpow.pop %v1332
      %v1334 = vmul.f32 %v1316, 1.442695
      %v1335 = vpow.pop %v1334
      %v1336 = vmul.f32 %v1317, 1.442695
      %v1337 = vpow.pop %v1336
      %v1338 = vmul.f32 %v1318, 1.442695
      %v1339 = vpow.pop %v1338
      %v1340 = vmul.f32 %v1319, 1.442695
      %v1341 = vpow.pop %v1340
      %v1342 = vmul.f32 %v1320, 1.442695
      %v1343 = vpow.pop %v1342
      %v1344 = vmul.f32 %v1321, 1.442695
      %v1345 = vpow.pop %v1344
      %v1346 = vmul.f32 %v1322, 1.442695
      %v1347 = vpow.pop %v1346
      %v1348 = vmul.f32 %v1323, 1.442695
      %v1349 = vpow.pop %v1348
      %v1350 = vmul.f32 %v1324, 1.442695
      %v1351 = vpow.pop %v1350
      %v1352 = vmul.f32 %v1325, 1.442695
      %v1353 = vpow.pop %v1352
      %v1354 = vmul.f32 %v1326, 1.442695
      %v1355 = vpow.pop %v1354
      %v1356 = vmul.f32 %v1327, 1.442695
      %v1357 = vpow.pop %v1356
      %v1358 = vmul.f32 %v1328, 1.442695
      %v1359 = vpow.pop %v1358
      %v1360 = vmul.f32 %v1329, 1.442695
      %v1361 = vpow.pop %v1360
      %v1362 = vadd.f32 %v1282, %v1331
      %v1363 = vadd.f32 %v1283, %v1333
      %v1364 = vadd.f32 %v1284, %v1335
      %v1365 = vadd.f32 %v1285, %v1337
      %v1366 = vadd.f32 %v1286, %v1339
      %v1367 = vadd.f32 %v1287, %v1341
      %v1368 = vadd.f32 %v1288, %v1343
      %v1369 = vadd.f32 %v1289, %v1345
      %v1370 = vadd.f32 %v1290, %v1347
      %v1371 = vadd.f32 %v1291, %v1349
      %v1372 = vadd.f32 %v1292, %v1351
      %v1373 = vadd.f32 %v1293, %v1353
      %v1374 = vadd.f32 %v1294, %v1355
      %v1375 = vadd.f32 %v1295, %v1357
      %v1376 = vadd.f32 %v1296, %v1359
      %v1377 = vadd.f32 %v1297, %v1361
      %1378 = vst [vmem:[#allocation2] sm:$0xff] %v1362
      %1379 = vst [vmem:[#allocation2 + $0x8] sm:$0xff] %v1363
      %1380 = vst [vmem:[#allocation2 + $0x10] sm:$0xff] %v1364
      %1381 = vst [vmem:[#allocation2 + $0x18] sm:$0xff] %v1365
      %1382 = vst [vmem:[#allocation2 + $0x20] sm:$0xff] %v1366
      %1383 = vst [vmem:[#allocation2 + $0x28] sm:$0xff] %v1367
      %1384 = vst [vmem:[#allocation2 + $0x30] sm:$0xff] %v1368
      %1385 = vst [vmem:[#allocation2 + $0x38] sm:$0xff] %v1369
      %1386 = vst [vmem:[#allocation2 + $0x40] sm:$0xff] %v1370
      %1387 = vst [vmem:[#allocation2 + $0x48] sm:$0xff] %v1371
      %1388 = vst [vmem:[#allocation2 + $0x50] sm:$0xff] %v1372
      %1389 = vst [vmem:[#allocation2 + $0x58] sm:$0xff] %v1373
      %1390 = vst [vmem:[#allocation2 + $0x60] sm:$0xff] %v1374
      %1391 = vst [vmem:[#allocation2 + $0x68] sm:$0xff] %v1375
      %1392 = vst [vmem:[#allocation2 + $0x70] sm:$0xff] %v1376
      %1393 = vst [vmem:[#allocation2 + $0x78] sm:$0xff] %v1377
      %s1394 = sshra.s32 %s122, 7
      %s1395 = sand.u32 %s122, 127
      %s1396 = sshra.s32 %s121, 3
      %s1397 = sand.u32 %s121, 7
      %s1398 = smul.u32 %s1396, 3
      %s1399 = sadd.s32 %s1394, %s1398
      %s1400 = smul.addr %s1399, 128
      %s1401 = scalar_lea.hbm %s6, %s1400
      %s1403 = sshll.u32 [#allocation2], 4
      %s1404 = int_to_ptr.vmem [resolvable:$true] %s1403
      %1406 = dma.vmem_to_hbm [thread:$0]  %s1404, 2048, %s1401, [#allocation4], 128, 384, 8
      %p1407 = scmp.ne.s32.totalorder %s119, %s120
      // Predicated region
      $region37: #{tpu_custom_call.1} parent=35 // pred_check
        %p1408 = pneg %p1407
      $region38: #{tpu_custom_call.1} parent=35 // pred_check_branch
        %1410 = sbr.rel (%p1408) target = $region40
      $region39: #{tpu_custom_call.1} parent=35 // pred_region
        %v1411 = vld [vmem:[#allocation2] sm:$0xff]
        %v1412 = vld [vmem:[#allocation2 + $0x8] sm:$0xff]
        %v1413 = vld [vmem:[#allocation2 + $0x10] sm:$0xff]
        %v1414 = vld [vmem:[#allocation2 + $0x18] sm:$0xff]
        %v1415 = vld [vmem:[#allocation2 + $0x20] sm:$0xff]
        %v1416 = vld [vmem:[#allocation2 + $0x28] sm:$0xff]
        %v1417 = vld [vmem:[#allocation2 + $0x30] sm:$0xff]
        %v1418 = vld [vmem:[#allocation2 + $0x38] sm:$0xff]
        %v1419 = vld [vmem:[#allocation2 + $0x40] sm:$0xff]
        %v1420 = vld [vmem:[#allocation2 + $0x48] sm:$0xff]
        %v1421 = vld [vmem:[#allocation2 + $0x50] sm:$0xff]
        %v1422 = vld [vmem:[#allocation2 + $0x58] sm:$0xff]
        %v1423 = vld [vmem:[#allocation2 + $0x60] sm:$0xff]
        %v1424 = vld [vmem:[#allocation2 + $0x68] sm:$0xff]
        %v1425 = vld [vmem:[#allocation2 + $0x70] sm:$0xff]
        %v1426 = vld [vmem:[#allocation2 + $0x78] sm:$0xff]
        %1427 = vxpose.xlu0.b32.start [1/16] %v1411, 128
        %1428 = vxpose.xlu0.b32.cont [2/16] %v1412, 128
        %1429 = vxpose.xlu0.b32.cont [3/16] %v1413, 128
        %1430 = vxpose.xlu0.b32.cont [4/16] %v1414, 128
        %1431 = vxpose.xlu0.b32.cont [5/16] %v1415, 128
        %1432 = vxpose.xlu0.b32.cont [6/16] %v1416, 128
        %1433 = vxpose.xlu0.b32.cont [7/16] %v1417, 128
        %1434 = vxpose.xlu0.b32.cont [8/16] %v1418, 128
        %1435 = vxpose.xlu0.b32.cont [9/16] %v1419, 128
        %1436 = vxpose.xlu0.b32.cont [10/16] %v1420, 128
        %1437 = vxpose.xlu0.b32.cont [11/16] %v1421, 128
        %1438 = vxpose.xlu0.b32.cont [12/16] %v1422, 128
        %1439 = vxpose.xlu0.b32.cont [13/16] %v1423, 128
        %1440 = vxpose.xlu0.b32.cont [14/16] %v1424, 128
        %1441 = vxpose.xlu0.b32.cont [15/16] %v1425, 128
        %1442 = vxpose.xlu0.b32.end [16/16] %v1426, 128
        %v1443 = vpop.trf.xlu0
        %v1444 = vpop.trf.xlu0
        %v1445 = vpop.trf.xlu0
        %v1446 = vpop.trf.xlu0
        %v1447 = vpop.trf.xlu0
        %v1448 = vpop.trf.xlu0
        %v1449 = vpop.trf.xlu0
        %v1450 = vpop.trf.xlu0
        %v1451 = vpop.trf.xlu0
        %v1452 = vpop.trf.xlu0
        %v1453 = vpop.trf.xlu0
        %v1454 = vpop.trf.xlu0
        %v1455 = vpop.trf.xlu0
        %v1456 = vpop.trf.xlu0
        %v1457 = vpop.trf.xlu0
        %v1458 = vpop.trf.xlu0
        %1459 = vst [vmem:[#allocation3] sm:$0xff] %v1443
        %1460 = vst [vmem:[#allocation3 + $0x8] sm:$0xff] %v1444
        %1461 = vst [vmem:[#allocation3 + $0x10] sm:$0xff] %v1445
        %1462 = vst [vmem:[#allocation3 + $0x18] sm:$0xff] %v1446
        %1463 = vst [vmem:[#allocation3 + $0x20] sm:$0xff] %v1447
        %1464 = vst [vmem:[#allocation3 + $0x28] sm:$0xff] %v1448
        %1465 = vst [vmem:[#allocation3 + $0x30] sm:$0xff] %v1449
        %1466 = vst [vmem:[#allocation3 + $0x38] sm:$0xff] %v1450
        %1467 = vst [vmem:[#allocation3 + $0x40] sm:$0xff] %v1451
        %1468 = vst [vmem:[#allocation3 + $0x48] sm:$0xff] %v1452
        %1469 = vst [vmem:[#allocation3 + $0x50] sm:$0xff] %v1453
        %1470 = vst [vmem:[#allocation3 + $0x58] sm:$0xff] %v1454
        %1471 = vst [vmem:[#allocation3 + $0x60] sm:$0xff] %v1455
        %1472 = vst [vmem:[#allocation3 + $0x68] sm:$0xff] %v1456
        %1473 = vst [vmem:[#allocation3 + $0x70] sm:$0xff] %v1457
        %1474 = vst [vmem:[#allocation3 + $0x78] sm:$0xff] %v1458
        %s1475 = sshra.s32 %s121, 7
        %s1476 = sand.u32 %s121, 127
        %s1477 = sshra.s32 %s122, 3
        %s1478 = sand.u32 %s122, 7
        %s1479 = smul.u32 %s1477, 3
        %s1480 = sadd.s32 %s1475, %s1479
        %s1481 = smul.addr %s1480, 128
        %s1482 = scalar_lea.hbm %s6, %s1481
        %s1483 = scalar_lea.sflag [#allocation4], 1
        %s1485 = sshll.u32 [#allocation3], 4
        %s1486 = int_to_ptr.vmem [resolvable:$true] %s1485
        %1488 = dma.vmem_to_hbm [thread:$0]  %s1486, 2048, %s1482, %s1483, 128, 384, 8
        %s1489 = smul.u32 8, 16
        %s1490 = smul.u32 %s1489, 1
        %s1491 = sshll.u32 %s1490, 4
        %1492 = dma.done %s1483, %s1491
      $region40: #{tpu_custom_call.1} parent=35 // pred_fallthru
        _
      %s1493 = smul.u32 8, 16
      %s1494 = smul.u32 %s1493, 1
      %s1495 = sshll.u32 %s1494, 4
      %1496 = dma.done [#allocation4], %s1495
    $region36: #{tpu_custom_call.1} parent=5 // pred_fallthru
      _
  $region6: #{tpu_custom_call.1} parent=0 // loop_footer
    %s26 = sadd.s32 1, %s22
  $region7: #{tpu_custom_call.1} parent=0 // loop_footer_branch
    %21 = sbr.rel target = $region3
  $region8: #{tpu_custom_call.1} parent=0 // loop_exit
    _
  %1497 = vsyncmov [#allocation4]
  %s1498 = vpop.sfrf %1497
  %p1499 = scmp.eq.s32.totalorder %s1498, 0
  %p1500 = pneg %p1499
  %1502 = shalt.err (%p1500)
  %s1503 = scalar_lea.sflag [#allocation4], 1
  %1504 = vsyncmov %s1503
  %s1505 = vpop.sfrf %1504
  %p1506 = scmp.eq.s32.totalorder %s1505, 0
  %p1507 = pneg %p1506
  %1509 = shalt.err (%p1507)

</llo_original>
